<compile_context>
chip_gen: v6e
topology: v6e:2x2x1
jax: 0.10.0
libtpu: 0.0.40
codegen_flags: <defaults>
</compile_context>

<pallas_src>
import jax
import jax.numpy as jnp
from jax.experimental import pallas as pl
from jax.experimental.pallas import tpu as pltpu


# ----------------------------------------------------------------------------
# Kernel 1: fused softmax + |fg - p_c| + fg-bit packing + per-class counts
# ----------------------------------------------------------------------------
def _softmax_pack_kernel(x_ref, t_ref, out_ref, cnt_ref, cnt_acc):
    # x_ref:   (1, C, TP) f32 logits
    # t_ref:   (1, 1, TP) i32 labels
    # out_ref: (1, C, TP) f32 |fg - softmax_c| with fg packed into the LSB
    # cnt_ref: (1, C, 1)  f32 total foreground count per (image, class)
    # cnt_acc: (C, 1)     f32 scratch accumulator (single width-1 store at end)
    k = pl.program_id(1)

    @pl.when(k == 0)
    def _():
        cnt_acc[...] = jnp.zeros_like(cnt_acc)

    x = x_ref[0]                                    # (C, TP)
    t = t_ref[0]                                    # (1, TP)

    # Softmax over the channel (sublane) axis; full C is in this block.
    m = jnp.max(x, axis=0, keepdims=True)
    e = jnp.exp(x - m)
    p = e * (1.0 / jnp.sum(e, axis=0, keepdims=True))

    cls = jax.lax.broadcasted_iota(jnp.int32, x.shape, 0)
    fg_bit = (t == cls).astype(jnp.int32)           # (C, TP) 0/1
    fg = fg_bit.astype(jnp.float32)

    # Clamp into the normal range so the packed value is never a denormal
    # (flush-to-zero safe through negation/sort); perturbation <= 1e-30.
    err = jnp.maximum(jnp.abs(fg - p), 1e-30)
    bits = pltpu.bitcast(err, jnp.int32)
    out_ref[0] = pltpu.bitcast((bits & jnp.int32(-2)) | fg_bit, jnp.float32)

    cnt_acc[...] += jnp.sum(fg, axis=1, keepdims=True)

    @pl.when(k == pl.num_programs(1) - 1)
    def _():
        cnt_ref[0] = cnt_acc[...]


# ----------------------------------------------------------------------------
# Kernel 2: fused lovasz_grad + dot over (image*class) rows
# ----------------------------------------------------------------------------
def _lovasz_reduce_kernel(pk_ref, gts_ref, loss_ref, tri_ref, carry_ref, acc_ref):
    # pk_ref:   (RB, TP) f32  sorted (descending) errors with fg bit in the LSB
    # gts_ref:  (RB, 1)  f32  total foreground count per row
    # loss_ref: (RB, 1)  f32  dot(errors_sorted, lovasz_grad)
    # tri_ref:  (TP, TP) bf16 scratch: upper-triangular ones (in-tile cumsum op)
    # carry_ref:(RB, 1)  f32  cumulative fg count from previous pixel tiles
    # acc_ref:  (RB, 1)  f32  loss accumulator
    k = pl.program_id(1)
    tp = pk_ref.shape[1]

    @pl.when(k == 0)
    def _():
        # Regenerated once per row block: cheap, and correct even if the row
        # axis is sharded across TensorCores (each core has its own scratch).
        r = jax.lax.broadcasted_iota(jnp.int32, (tp, tp), 0)
        c = jax.lax.broadcasted_iota(jnp.int32, (tp, tp), 1)
        tri_ref[...] = (r <= c).astype(jnp.bfloat16)
        carry_ref[...] = jnp.zeros_like(carry_ref)
        acc_ref[...] = jnp.zeros_like(acc_ref)

    bits = pltpu.bitcast(pk_ref[...], jnp.int32)
    fg = (bits & 1).astype(jnp.float32)                       # (RB, TP)
    e = pltpu.bitcast(bits & jnp.int32(-2), jnp.float32)      # clean errors
    gts = gts_ref[...]                                        # (RB, 1)

    # Global inclusive cumsum of fg: bf16 MXU matmul (exact for 0/1 with f32
    # accumulate) + per-row carry from previous pixel tiles.
    cum = jnp.dot(fg.astype(jnp.bfloat16), tri_ref[...],
                  preferred_element_type=jnp.float32) + carry_ref[...]
    pos = (k * tp + 1
           + jax.lax.broadcasted_iota(jnp.int32, fg.shape, 1)).astype(jnp.float32)

    # delta = jaccard[i] - jaccard[i-1], folded into a single reciprocal:
    #   U      = gts + pos - cum          (union at i)
    #   U_prev = U - 1 + fg               (union at i-1)
    #   delta  = ((gts - cum) + fg * pos) / (U * U_prev)
    # U*U_prev == 0 only for absent classes / zero-padded rows at pos == 1,
    # whose numerator is 0 and whose loss is masked out later -> clamp is safe.
    U = gts + pos - cum
    U_prev = U - 1.0 + fg
    num = (gts - cum) + fg * pos
    delta = num * pl.reciprocal(jnp.maximum(U * U_prev, 1e-12))

    acc_ref[...] += jnp.sum(e * delta, axis=1, keepdims=True)
    carry_ref[...] += jnp.sum(fg, axis=1, keepdims=True)

    @pl.when(k == pl.num_programs(1) - 1)
    def _():
        loss_ref[...] = acc_ref[...]


# ----------------------------------------------------------------------------
# Helpers
# ----------------------------------------------------------------------------
def _pick_tile(p, cap):
    """Largest multiple of 128 that divides p and is <= cap."""
    cap = max(128, min(cap, p))
    t = (cap // 128) * 128
    while t > 128 and p % t != 0:
        t -= 128
    return t


def _round_up(x, m):
    return ((x + m - 1) // m) * m


@jax.jit
def lovasz_loss(logits, target):
    """Equivalent of LovaszLoss().forward(input, target) for NCHW input."""
    N, C, H, W = logits.shape
    P = H * W
    assert P % 128 == 0, "H*W must be a multiple of 128"

    x = logits.reshape(N, C, P).astype(jnp.float32)
    t = target.reshape(N, 1, P).astype(jnp.int32)

    # --- Kernel 1: VMEM-budgeted pixel tile (generation-safe: fits v7x 64MiB) -
    # per-step VMEM ~ 2*(4C+4+4C)*tp1 double-buffered IO + ~4 f32 temporaries.
    vmem_budget = 24 << 20
    tp1 = _pick_tile(P, min(32768, vmem_budget // (32 * C + 8)))
    packed, counts = pl.pallas_call(
        _softmax_pack_kernel,
        out_shape=(
            jax.ShapeDtypeStruct((N, C, P), jnp.float32),
            jax.ShapeDtypeStruct((N, C, 1), jnp.float32),
        ),
        grid_spec=pltpu.PrefetchScalarGridSpec(
            num_scalar_prefetch=0,
            grid=(N, P // tp1),
            in_specs=[
                pl.BlockSpec((1, C, tp1), lambda n, k: (n, 0, k)),
                pl.BlockSpec((1, 1, tp1), lambda n, k: (n, 0, k)),
            ],
            out_specs=[
                pl.BlockSpec((1, C, tp1), lambda n, k: (n, 0, k)),
                pl.BlockSpec((1, C, 1), lambda n, k: (n, 0, 0)),
            ],
            scratch_shapes=[pltpu.VMEM((C, 1), jnp.float32)],
        ),
        compiler_params=pltpu.CompilerParams(
            dimension_semantics=("parallel", "arbitrary"),
            vmem_limit_bytes=48 << 20),
    )(x, t)

    # --- Descending sort of the single packed array (fg rides in the LSB) ----
    # TODO(synk): the per-(image, class) sort has no clean Pallas TPU
    # equivalent; it is performed with XLA's lax.sort.
    NC = N * C
    packed_sorted = -jax.lax.sort(-packed.reshape(NC, P), dimension=-1)

    # --- Kernel 2: rows = flattened (image, class) -> filled MXU M axis ------
    RB = _round_up(NC, 8) if NC <= 256 else 256
    NC_pad = _round_up(NC, RB)
    gts = counts.reshape(NC, 1)
    if NC_pad != NC:
        packed_sorted = jnp.pad(packed_sorted, ((0, NC_pad - NC), (0, 0)))
        gts = jnp.pad(gts, ((0, NC_pad - NC), (0, 0)))

    tp2 = _pick_tile(P, 256)
    # TODO(synk): for NC < 128 a pltpu.roll-based shift-add prefix sum would
    # avoid the under-filled MXU entirely; the batched bf16 matmul is kept for
    # robustness and scales to realistic N*C.
    losses = pl.pallas_call(
        _lovasz_reduce_kernel,
        out_shape=jax.ShapeDtypeStruct((NC_pad, 1), jnp.float32),
        grid_spec=pltpu.PrefetchScalarGridSpec(
            num_scalar_prefetch=0,
            grid=(NC_pad // RB, P // tp2),
            in_specs=[
                pl.BlockSpec((RB, tp2), lambda r, k: (r, k)),
                pl.BlockSpec((RB, 1), lambda r, k: (r, 0)),
            ],
            out_specs=pl.BlockSpec((RB, 1), lambda r, k: (r, 0)),
            scratch_shapes=[
                pltpu.VMEM((tp2, tp2), jnp.bfloat16),
                pltpu.VMEM((RB, 1), jnp.float32),
                pltpu.VMEM((RB, 1), jnp.float32),
            ],
        ),
        compiler_params=pltpu.CompilerParams(
            dimension_semantics=("parallel", "arbitrary"),
            vmem_limit_bytes=32 << 20),
    )(packed_sorted, gts)

    # --- Cheap O(N*C) combination: mean over present classes, then images ----
    losses = losses[:NC, 0].reshape(N, C)
    counts = counts[..., 0]                       # (N, C)
    present = counts > 0.0                        # classes='present'
    per_image = jnp.sum(jnp.where(present, losses, 0.0), axis=1) / jnp.maximum(
        jnp.sum(present.astype(jnp.float32), axis=1), 1.0)
    return jnp.mean(per_image)                    # per_image=True outer mean


def _reference(logits, target):
    """Pure-JAX replica of the PyTorch Lovasz-Softmax forward (verification)."""
    N, C, H, W = logits.shape
    pred = jax.nn.softmax(logits.astype(jnp.float32), axis=1).reshape(N, C, -1)
    labels = target.reshape(N, -1)
    total = 0.0
    for n in range(N):
        class_losses = []
        for c in range(C):
            fg = (labels[n] == c).astype(jnp.float32)
            if float(jnp.sum(fg)) == 0:           # classes='present'
                continue
            errors = jnp.abs(fg - pred[n, c])
            order = jnp.argsort(-errors)          # descending
            e_s = errors[order]
            fg_s = fg[order]
            gts = jnp.sum(fg_s)
            inter = gts - jnp.cumsum(fg_s)
            union = gts + jnp.cumsum(1.0 - fg_s)
            jacc = 1.0 - inter / union
            grad = jnp.concatenate([jacc[:1], jacc[1:] - jacc[:-1]])
            class_losses.append(float(jnp.dot(e_s, grad)))
        total += sum(class_losses) / max(len(class_losses), 1)
    return total / N


if __name__ == "__main__":
    key = jax.random.PRNGKey(0)
    k1, k2 = jax.random.split(key, 2)

    N, C, H, W = 2, 4, 16, 16
    logits = jax.random.normal(k1, (N, C, H, W), dtype=jnp.float32)
    target = jax.random.randint(k2, (N, H, W), 0, C, dtype=jnp.int32)
    # Make class 3 absent in image 0 to exercise the 'present'-classes skip.
    target = target.at[0].set(jnp.where(target[0] == 3, 0, target[0]))

    loss = lovasz_loss(logits, target)
    loss = jax.block_until_ready(loss)

    ref = _reference(logits, target)
    assert abs(float(loss) - float(ref)) < 1e-4, (float(loss), float(ref))

    print("KERNEL_OK")
</pallas_src>

<mosaic_0001>
module attributes {stable_mosaic.version = 11 : i64} {
  func.func @_softmax_pack_kernel(%arg0: i32, %arg1: i32, %arg2: memref<1x4x256xf32, #tpu.memory_space<vmem>>, %arg3: memref<1x1x256xi32, #tpu.memory_space<vmem>>, %arg4: memref<1x4x256xf32, #tpu.memory_space<vmem>>, %arg5: memref<1x4x1xf32, #tpu.memory_space<vmem>>, %arg6: memref<4x1xf32, #tpu.memory_space<vmem>>) attributes {dimension_semantics = [#tpu.dimension_semantics<parallel>, #tpu.dimension_semantics<arbitrary>], iteration_bounds = array<i64: 2, 1>, scalar_prefetch = 0 : i64, scratch_operands = 1 : i64, tpu.core_type = #tpu.core_type<tc>, window_params = [{transform_indices = @transform_0, window_bounds = array<i64: 1, 4, 256>}, {transform_indices = @transform_1, window_bounds = array<i64: 1, 1, 256>}, {transform_indices = @transform_2, window_bounds = array<i64: 1, 4, 256>}, {transform_indices = @transform_3, window_bounds = array<i64: 1, 4, 1>}]} {
    %c0_i32 = arith.constant 0 : i32
    %0 = arith.cmpi eq, %arg1, %c0_i32 : i32
    %1 = arith.extui %0 : i1 to i32
    %c0_i32_0 = arith.constant 0 : i32
    %2 = arith.cmpi ne, %1, %c0_i32_0 : i32
    scf.if %2 {
      %cst_19 = arith.constant 0.000000e+00 : f32
      %43 = vector.broadcast %cst_19 : f32 to vector<4x1xf32>
      %c0_20 = arith.constant 0 : index
      %c0_21 = arith.constant 0 : index
      %44 = vector.load %arg6[%c0_20, %c0_21] : memref<4x1xf32, #tpu.memory_space<vmem>>, vector<4x1xf32>
      tpu.vector_store %arg6[%c0_20, %c0_21], %43 {strides = array<i32>} : memref<4x1xf32, #tpu.memory_space<vmem>>, vector<4x1xf32>,
    } else {
    }
    %c0 = arith.constant 0 : index
    %c0_1 = arith.constant 0 : index
    %c0_2 = arith.constant 0 : index
    %3 = vector.load %arg2[%c0, %c0_1, %c0_2] : memref<1x4x256xf32, #tpu.memory_space<vmem>>, vector<1x4x256xf32>
    %4 = vector.shape_cast %3 : vector<1x4x256xf32> to vector<4x256xf32>
    %c0_3 = arith.constant 0 : index
    %c0_4 = arith.constant 0 : index
    %c0_5 = arith.constant 0 : index
    %5 = vector.load %arg3[%c0_3, %c0_4, %c0_5] : memref<1x1x256xi32, #tpu.memory_space<vmem>>, vector<1x1x256xi32>
    %6 = vector.shape_cast %5 : vector<1x1x256xi32> to vector<1x256xi32>
    %cst = arith.constant dense<0xFF800000> : vector<256xf32>
    %7 = vector.multi_reduction <maximumf>, %4, %cst [0] : vector<4x256xf32> to vector<256xf32>
    %8 = vector.shape_cast %7 : vector<256xf32> to vector<1x256xf32>
    %9 = vector.broadcast %8 : vector<1x256xf32> to vector<4x256xf32>
    %10 = arith.subf %4, %9 : vector<4x256xf32>
    %11 = math.exp %10 : vector<4x256xf32>
    %cst_6 = arith.constant dense<0.000000e+00> : vector<256xf32>
    %12 = vector.multi_reduction <add>, %11, %cst_6 [0] : vector<4x256xf32> to vector<256xf32>
    %13 = vector.shape_cast %12 : vector<256xf32> to vector<1x256xf32>
    %cst_7 = arith.constant 1.000000e+00 : f32
    %14 = vector.broadcast %cst_7 : f32 to vector<1x256xf32>
    %15 = arith.divf %14, %13 : vector<1x256xf32>
    %16 = vector.broadcast %15 : vector<1x256xf32> to vector<4x256xf32>
    %17 = arith.mulf %11, %16 : vector<4x256xf32>
    %18 = tpu.iota {dimensions = array<i32: 0>} : vector<4x256xi32>
    %19 = vector.broadcast %6 : vector<1x256xi32> to vector<4x256xi32>
    %20 = arith.cmpi eq, %19, %18 : vector<4x256xi32>
    %21 = arith.extui %20 : vector<4x256xi1> to vector<4x256xi32>
    %22 = arith.sitofp %21 : vector<4x256xi32> to vector<4x256xf32>
    %23 = arith.subf %22, %17 : vector<4x256xf32>
    %24 = math.absf %23 : vector<4x256xf32>
    %cst_8 = arith.constant 1.000000e-30 : f32
    %25 = vector.broadcast %cst_8 : f32 to vector<4x256xf32>
    %26 = arith.maximumf %24, %25 : vector<4x256xf32>
    %27 = tpu.bitcast %26 : vector<4x256xf32> -> vector<4x256xi32>
    %c-2_i32 = arith.constant -2 : i32
    %28 = vector.broadcast %c-2_i32 : i32 to vector<4x256xi32>
    %29 = arith.andi %27, %28 : vector<4x256xi32>
    %30 = arith.ori %29, %21 : vector<4x256xi32>
    %31 = tpu.bitcast %30 : vector<4x256xi32> -> vector<4x256xf32>
    %c0_9 = arith.constant 0 : index
    %c0_10 = arith.constant 0 : index
    %c0_11 = arith.constant 0 : index
    %32 = vector.load %arg4[%c0_9, %c0_10, %c0_11] : memref<1x4x256xf32, #tpu.memory_space<vmem>>, vector<1x4x256xf32>
    %33 = vector.shape_cast %32 : vector<1x4x256xf32> to vector<4x256xf32>
    %34 = vector.shape_cast %31 : vector<4x256xf32> to vector<1x4x256xf32>
    tpu.vector_store %arg4[%c0_9, %c0_10, %c0_11], %34 {strides = array<i32>} : memref<1x4x256xf32, #tpu.memory_space<vmem>>, vector<1x4x256xf32>,
    %c0_12 = arith.constant 0 : index
    %c0_13 = arith.constant 0 : index
    %35 = vector.load %arg6[%c0_12, %c0_13] : memref<4x1xf32, #tpu.memory_space<vmem>>, vector<4x1xf32>
    %cst_14 = arith.constant dense<0.000000e+00> : vector<4xf32>
    %36 = vector.multi_reduction <add>, %22, %cst_14 [1] : vector<4x256xf32> to vector<4xf32>
    %37 = vector.shape_cast %36 : vector<4xf32> to vector<4x1xf32>
    %38 = arith.addf %35, %37 : vector<4x1xf32>
    %c0_15 = arith.constant 0 : index
    %c0_16 = arith.constant 0 : index
    %39 = vector.load %arg6[%c0_15, %c0_16] : memref<4x1xf32, #tpu.memory_space<vmem>>, vector<4x1xf32>
    tpu.vector_store %arg6[%c0_15, %c0_16], %38 {strides = array<i32>} : memref<4x1xf32, #tpu.memory_space<vmem>>, vector<4x1xf32>,
    %c0_i32_17 = arith.constant 0 : i32
    %40 = arith.cmpi eq, %arg1, %c0_i32_17 : i32
    %41 = arith.extui %40 : i1 to i32
    %c0_i32_18 = arith.constant 0 : i32
    %42 = arith.cmpi ne, %41, %c0_i32_18 : i32
    scf.if %42 {
      %c0_19 = arith.constant 0 : index
      %c0_20 = arith.constant 0 : index
      %43 = vector.load %arg6[%c0_19, %c0_20] : memref<4x1xf32, #tpu.memory_space<vmem>>, vector<4x1xf32>
      %c0_21 = arith.constant 0 : index
      %c0_22 = arith.constant 0 : index
      %c0_23 = arith.constant 0 : index
      %44 = vector.load %arg5[%c0_21, %c0_22, %c0_23] : memref<1x4x1xf32, #tpu.memory_space<vmem>>, vector<1x4x1xf32>
      %45 = vector.shape_cast %44 : vector<1x4x1xf32> to vector<4x1xf32>
      %46 = vector.shape_cast %43 : vector<4x1xf32> to vector<1x4x1xf32>
      tpu.vector_store %arg5[%c0_21, %c0_22, %c0_23], %46 {strides = array<i32>} : memref<1x4x1xf32, #tpu.memory_space<vmem>>, vector<1x4x1xf32>,
    } else {
    }
    return
  }
  func.func @transform_0(%arg0: i32, %arg1: i32) -> (i32, i32, i32) {
    %c0_i32 = arith.constant 0 : i32
    %c0_i32_0 = arith.constant 0 : i32
    return %arg0, %c0_i32, %arg1 : i32, i32, i32
  }
  func.func @transform_1(%arg0: i32, %arg1: i32) -> (i32, i32, i32) {
    %c0_i32 = arith.constant 0 : i32
    %c0_i32_0 = arith.constant 0 : i32
    return %arg0, %c0_i32, %arg1 : i32, i32, i32
  }
  func.func @transform_2(%arg0: i32, %arg1: i32) -> (i32, i32, i32) {
    %c0_i32 = arith.constant 0 : i32
    %c0_i32_0 = arith.constant 0 : i32
    return %arg0, %c0_i32, %arg1 : i32, i32, i32
  }
  func.func @transform_3(%arg0: i32, %arg1: i32) -> (i32, i32, i32) {
    %c0_i32 = arith.constant 0 : i32
    %c0_i32_0 = arith.constant 0 : i32
    %c0_i32_1 = arith.constant 0 : i32
    return %arg0, %c0_i32, %c0_i32_0 : i32, i32, i32
  }
}

module attributes {stable_mosaic.version = 11 : i64} {
  func.func @_lovasz_reduce_kernel(%arg0: i32, %arg1: i32, %arg2: memref<8x256xf32, #tpu.memory_space<vmem>>, %arg3: memref<8x1xf32, #tpu.memory_space<vmem>>, %arg4: memref<8x1xf32, #tpu.memory_space<vmem>>, %arg5: memref<256x256xbf16, #tpu.memory_space<vmem>>, %arg6: memref<8x1xf32, #tpu.memory_space<vmem>>, %arg7: memref<8x1xf32, #tpu.memory_space<vmem>>) attributes {dimension_semantics = [#tpu.dimension_semantics<parallel>, #tpu.dimension_semantics<arbitrary>], iteration_bounds = array<i64: 1, 1>, scalar_prefetch = 0 : i64, scratch_operands = 3 : i64, tpu.core_type = #tpu.core_type<tc>, window_params = [{transform_indices = @transform_0, window_bounds = array<i64: 8, 256>}, {transform_indices = @transform_1, window_bounds = array<i64: 8, 1>}, {transform_indices = @transform_2, window_bounds = array<i64: 8, 1>}]} {
    %c0_i32 = arith.constant 0 : i32
    %0 = arith.cmpi eq, %arg1, %c0_i32 : i32
    %1 = arith.extui %0 : i1 to i32
    %c0_i32_0 = arith.constant 0 : i32
    %2 = arith.cmpi ne, %1, %c0_i32_0 : i32
    scf.if %2 {
      %53 = tpu.iota {dimensions = array<i32: 0>} : vector<256x256xi32>
      %54 = tpu.iota {dimensions = array<i32: 1>} : vector<256x256xi32>
      %55 = arith.cmpi sle, %53, %54 : vector<256x256xi32>
      %56 = arith.extui %55 : vector<256x256xi1> to vector<256x256xi32>
      %57 = arith.sitofp %56 : vector<256x256xi32> to vector<256x256xf32>
      %58 = arith.truncf %57 : vector<256x256xf32> to vector<256x256xbf16>
      %c0_23 = arith.constant 0 : index
      %c0_24 = arith.constant 0 : index
      %59 = vector.load %arg5[%c0_23, %c0_24] : memref<256x256xbf16, #tpu.memory_space<vmem>>, vector<256x256xbf16>
      tpu.vector_store %arg5[%c0_23, %c0_24], %58 {strides = array<i32>} : memref<256x256xbf16, #tpu.memory_space<vmem>>, vector<256x256xbf16>,
      %cst_25 = arith.constant 0.000000e+00 : f32
      %60 = vector.broadcast %cst_25 : f32 to vector<8x1xf32>
      %c0_26 = arith.constant 0 : index
      %c0_27 = arith.constant 0 : index
      %61 = vector.load %arg6[%c0_26, %c0_27] : memref<8x1xf32, #tpu.memory_space<vmem>>, vector<8x1xf32>
      tpu.vector_store %arg6[%c0_26, %c0_27], %60 {strides = array<i32>} : memref<8x1xf32, #tpu.memory_space<vmem>>, vector<8x1xf32>,
      %cst_28 = arith.constant 0.000000e+00 : f32
      %62 = vector.broadcast %cst_28 : f32 to vector<8x1xf32>
      %c0_29 = arith.constant 0 : index
      %c0_30 = arith.constant 0 : index
      %63 = vector.load %arg7[%c0_29, %c0_30] : memref<8x1xf32, #tpu.memory_space<vmem>>, vector<8x1xf32>
      tpu.vector_store %arg7[%c0_29, %c0_30], %62 {strides = array<i32>} : memref<8x1xf32, #tpu.memory_space<vmem>>, vector<8x1xf32>,
    } else {
    }
    %c0 = arith.constant 0 : index
    %c0_1 = arith.constant 0 : index
    %3 = vector.load %arg2[%c0, %c0_1] : memref<8x256xf32, #tpu.memory_space<vmem>>, vector<8x256xf32>
    %4 = tpu.bitcast %3 : vector<8x256xf32> -> vector<8x256xi32>
    %c1_i32 = arith.constant 1 : i32
    %5 = vector.broadcast %c1_i32 : i32 to vector<8x256xi32>
    %6 = arith.andi %4, %5 : vector<8x256xi32>
    %7 = arith.sitofp %6 : vector<8x256xi32> to vector<8x256xf32>
    %c-2_i32 = arith.constant -2 : i32
    %8 = vector.broadcast %c-2_i32 : i32 to vector<8x256xi32>
    %9 = arith.andi %4, %8 : vector<8x256xi32>
    %10 = tpu.bitcast %9 : vector<8x256xi32> -> vector<8x256xf32>
    %c0_2 = arith.constant 0 : index
    %c0_3 = arith.constant 0 : index
    %11 = vector.load %arg3[%c0_2, %c0_3] : memref<8x1xf32, #tpu.memory_space<vmem>>, vector<8x1xf32>
    %12 = arith.truncf %7 : vector<8x256xf32> to vector<8x256xbf16>
    %c0_4 = arith.constant 0 : index
    %c0_5 = arith.constant 0 : index
    %13 = vector.load %arg5[%c0_4, %c0_5] : memref<256x256xbf16, #tpu.memory_space<vmem>>, vector<256x256xbf16>
    %cst = arith.constant dense<0.000000e+00> : vector<8x256xf32>
    %14 = tpu.matmul %12, %13, %cst {dimension_numbers = #tpu.dot_dimension_numbers<[1], [0], [0], [1], [0, 0, 1, 1], [], []>} : vector<8x256xbf16>, vector<256x256xbf16>, vector<8x256xf32> -> vector<8x256xf32>
    %c0_6 = arith.constant 0 : index
    %c0_7 = arith.constant 0 : index
    %15 = vector.load %arg6[%c0_6, %c0_7] : memref<8x1xf32, #tpu.memory_space<vmem>>, vector<8x1xf32>
    %16 = vector.broadcast %15 : vector<8x1xf32> to vector<8x256xf32>
    %17 = arith.addf %14, %16 : vector<8x256xf32>
    %c256_i32 = arith.constant 256 : i32
    %18 = arith.muli %arg1, %c256_i32 : i32
    %c1_i32_8 = arith.constant 1 : i32
    %19 = arith.addi %18, %c1_i32_8 : i32
    %20 = tpu.iota {dimensions = array<i32: 1>} : vector<8x256xi32>
    %21 = vector.broadcast %19 : i32 to vector<8x256xi32>
    %22 = arith.addi %21, %20 : vector<8x256xi32>
    %23 = arith.sitofp %22 : vector<8x256xi32> to vector<8x256xf32>
    %24 = vector.broadcast %11 : vector<8x1xf32> to vector<8x256xf32>
    %25 = arith.addf %24, %23 : vector<8x256xf32>
    %26 = arith.subf %25, %17 : vector<8x256xf32>
    %cst_9 = arith.constant 1.000000e+00 : f32
    %27 = vector.broadcast %cst_9 : f32 to vector<8x256xf32>
    %28 = arith.subf %26, %27 : vector<8x256xf32>
    %29 = arith.addf %28, %7 : vector<8x256xf32>
    %30 = vector.broadcast %11 : vector<8x1xf32> to vector<8x256xf32>
    %31 = arith.subf %30, %17 : vector<8x256xf32>
    %32 = arith.mulf %7, %23 : vector<8x256xf32>
    %33 = arith.addf %31, %32 : vector<8x256xf32>
    %34 = arith.mulf %26, %29 : vector<8x256xf32>
    %cst_10 = arith.constant 9.99999996E-13 : f32
    %35 = vector.broadcast %cst_10 : f32 to vector<8x256xf32>
    %36 = arith.maximumf %34, %35 : vector<8x256xf32>
    %37 = tpu.reciprocal %36 : vector<8x256xf32> -> vector<8x256xf32>
    %38 = arith.mulf %33, %37 : vector<8x256xf32>
    %c0_11 = arith.constant 0 : index
    %c0_12 = arith.constant 0 : index
    %39 = vector.load %arg7[%c0_11, %c0_12] : memref<8x1xf32, #tpu.memory_space<vmem>>, vector<8x1xf32>
    %40 = arith.mulf %10, %38 : vector<8x256xf32>
    %cst_13 = arith.constant dense<0.000000e+00> : vector<8xf32>
    %41 = vector.multi_reduction <add>, %40, %cst_13 [1] : vector<8x256xf32> to vector<8xf32>
    %42 = vector.shape_cast %41 : vector<8xf32> to vector<8x1xf32>
    %43 = arith.addf %39, %42 : vector<8x1xf32>
    %c0_14 = arith.constant 0 : index
    %c0_15 = arith.constant 0 : index
    %44 = vector.load %arg7[%c0_14, %c0_15] : memref<8x1xf32, #tpu.memory_space<vmem>>, vector<8x1xf32>
    tpu.vector_store %arg7[%c0_14, %c0_15], %43 {strides = array<i32>} : memref<8x1xf32, #tpu.memory_space<vmem>>, vector<8x1xf32>,
    %c0_16 = arith.constant 0 : index
    %c0_17 = arith.constant 0 : index
    %45 = vector.load %arg6[%c0_16, %c0_17] : memref<8x1xf32, #tpu.memory_space<vmem>>, vector<8x1xf32>
    %cst_18 = arith.constant dense<0.000000e+00> : vector<8xf32>
    %46 = vector.multi_reduction <add>, %7, %cst_18 [1] : vector<8x256xf32> to vector<8xf32>
    %47 = vector.shape_cast %46 : vector<8xf32> to vector<8x1xf32>
    %48 = arith.addf %45, %47 : vector<8x1xf32>
    %c0_19 = arith.constant 0 : index
    %c0_20 = arith.constant 0 : index
    %49 = vector.load %arg6[%c0_19, %c0_20] : memref<8x1xf32, #tpu.memory_space<vmem>>, vector<8x1xf32>
    tpu.vector_store %arg6[%c0_19, %c0_20], %48 {strides = array<i32>} : memref<8x1xf32, #tpu.memory_space<vmem>>, vector<8x1xf32>,
    %c0_i32_21 = arith.constant 0 : i32
    %50 = arith.cmpi eq, %arg1, %c0_i32_21 : i32
    %51 = arith.extui %50 : i1 to i32
    %c0_i32_22 = arith.constant 0 : i32
    %52 = arith.cmpi ne, %51, %c0_i32_22 : i32
    scf.if %52 {
      %c0_23 = arith.constant 0 : index
      %c0_24 = arith.constant 0 : index
      %53 = vector.load %arg7[%c0_23, %c0_24] : memref<8x1xf32, #tpu.memory_space<vmem>>, vector<8x1xf32>
      %c0_25 = arith.constant 0 : index
      %c0_26 = arith.constant 0 : index
      %54 = vector.load %arg4[%c0_25, %c0_26] : memref<8x1xf32, #tpu.memory_space<vmem>>, vector<8x1xf32>
      tpu.vector_store %arg4[%c0_25, %c0_26], %53 {strides = array<i32>} : memref<8x1xf32, #tpu.memory_space<vmem>>, vector<8x1xf32>,
    } else {
    }
    return
  }
  func.func @transform_0(%arg0: i32, %arg1: i32) -> (i32, i32) {
    %c0_i32 = arith.constant 0 : i32
    return %arg0, %arg1 : i32, i32
  }
  func.func @transform_1(%arg0: i32, %arg1: i32) -> (i32, i32) {
    %c0_i32 = arith.constant 0 : i32
    %c0_i32_0 = arith.constant 0 : i32
    return %arg0, %c0_i32 : i32, i32
  }
  func.func @transform_2(%arg0: i32, %arg1: i32) -> (i32, i32) {
    %c0_i32 = arith.constant 0 : i32
    %c0_i32_0 = arith.constant 0 : i32
    return %arg0, %c0_i32 : i32, i32
  }
}

</mosaic_0001>

<llo_original>
// kernel: neg.0
$region0: #{neg.0}
  #allocation0 [shape = 's32[1]{0}', space=sflag, size = 0x4, scoped, tag = 'scoped memory for neg.0']
  %s0 = inlined_call_operand.vmem [shape: f32[2,4,256], index: 0, kind: input, shape index: {}]
  %s1 = inlined_call_operand.vmem [shape: f32[2,4,256], index: 1, kind: output, shape index: {}]
  %v2 = vld [vmem:[%s0] sm:$0xf]
  %3 = xla_tuple %v2
  %4 = xla_tuple %3
  %v5 = vxor.u32 %v2, 2147483648
  %6 = xla_tuple %v5
  %7 = vst [vmem:[%s1] sm:$0xf] %v5
  %s8 = scalar_lea.vmem %s0, 8
  %v9 = vld [vmem:[%s8] sm:$0xf]
  %10 = xla_tuple %v9
  %11 = xla_tuple %10
  %v12 = vxor.u32 %v9, 2147483648
  %13 = xla_tuple %v12
  %s14 = scalar_lea.vmem %s1, 8
  %15 = vst [vmem:[%s14] sm:$0xf] %v12
  %s16 = scalar_lea.vmem %s0, 4
  %v17 = vld [vmem:[%s16] sm:$0xf]
  %18 = xla_tuple %v17
  %19 = xla_tuple %18
  %v20 = vxor.u32 %v17, 2147483648
  %21 = xla_tuple %v20
  %s22 = scalar_lea.vmem %s1, 4
  %23 = vst [vmem:[%s22] sm:$0xf] %v20
  %s24 = scalar_lea.vmem %s0, 12
  %v25 = vld [vmem:[%s24] sm:$0xf]
  %26 = xla_tuple %v25
  %27 = xla_tuple %26
  %v28 = vxor.u32 %v25, 2147483648
  %29 = xla_tuple %v28
  %s30 = scalar_lea.vmem %s1, 12
  %31 = vst [vmem:[%s30] sm:$0xf] %v28

// kernel: neg.3
$region0: #{neg.3}
  #allocation0 [shape = 's32[1]{0}', space=sflag, size = 0x4, scoped, tag = 'scoped memory for neg.3']
  %s0 = inlined_call_operand.vmem [shape: f32[8,256], index: 0, kind: input, shape index: {}]
  %s1 = inlined_call_operand.vmem [shape: f32[8,256], index: 1, kind: output, shape index: {}]
  %v2 = vld [vmem:[%s0] sm:$0xff]
  %3 = xla_tuple %v2
  %4 = xla_tuple %3
  %v5 = vxor.u32 %v2, 2147483648
  %6 = xla_tuple %v5
  %7 = vst [vmem:[%s1] sm:$0xff] %v5
  %s8 = scalar_lea.vmem %s0, 8
  %v9 = vld [vmem:[%s8] sm:$0xff]
  %10 = xla_tuple %v9
  %11 = xla_tuple %10
  %v12 = vxor.u32 %v9, 2147483648
  %13 = xla_tuple %v12
  %s14 = scalar_lea.vmem %s1, 8
  %15 = vst [vmem:[%s14] sm:$0xff] %v12

// kernel: squeeze.2
$region0: #{squeeze.2}
  %s0 = inlined_call_operand.vmem [shape: f32[8], index: 0, kind: input, shape index: {}]
  %s1 = inlined_call_operand.vmem [shape: f32[2,4], index: 1, kind: output, shape index: {}]
  $region1: #{squeeze.2} parent=0
    #allocation0 [shape = 'u8[4096]{0}', space=vmem, size = 0x1000, scoped, tag = 'scoped mem for output reshape']
    #allocation1 [shape = 'u8[4096]{0}', space=vmem, size = 0x1000, scoped, tag = 'scoped mem for input reshape']
    %s3 = sshll.u32 1, 1
    %s4 = ssub.s32 %s3, 1
    %v5 = vld [vmem:[%s0] sm:%s4]
    %6 = vst [vmem:[#allocation1] sm:%s4] %v5
    %v7 = vld [vmem:[#allocation1] sm:$0x1]
    %vm8 = vcmask 31744
    %9 = vst.msk [vmem:[#allocation0] sm:$0x1] %vm8, %v7
    %v10 = vld [vmem:[#allocation1] sm:$0x1]
    %11 = vrot.lane.b32.xlu0 %v10, 124
    %v12 = vpop.permute.xlu0 %11
    %vm13 = vcmask 31744
    %s14 = scalar_lea.vmem [#allocation0], 1
    %15 = vst.msk [vmem:[%s14] sm:$0x1] %vm13, %v12
    %s17 = sshll.u32 1, 2
    %s18 = ssub.s32 %s17, 1
    %v20 = vld [vmem:[#allocation0] sm:%s18]
    %s21 = sshll.u32 1, 2
    %s22 = ssub.s32 %s21, 1
    %23 = vst [vmem:[%s1] sm:%s22] %v20

// kernel: lovasz_loss.2
$region0: #{lovasz_loss.2}
  #allocation0 [shape = 'u32[]', space=smem, size = 0x4, offset = 0x4, fixed_abs, tag = 'smem constant byte address 0x4 - core index']
  #allocation1 [shape = 'u32[144,128]{1,0:T(1,128)}', space=vmem, size = 0x12000, scoped, tag = 'internal scratch']
  #allocation2 [shape = 'f32[4,1]{1,0:T(4,128)}', space=vmem, size = 0x800, scoped, tag = 'scratch operand']
  %s0 = inlined_call_operand.vmem [shape: f32[2,4,256], index: 0, kind: input, shape index: {}]
  %s1 = inlined_call_operand.vmem [shape: s32[2,1,256], index: 1, kind: input, shape index: {}]
  %s2 = inlined_call_operand.vmem [shape: f32[2,4,256], index: 2, kind: output, shape index: {0}]
  %s3 = inlined_call_operand.vmem [shape: f32[2,4,1], index: 3, kind: output, shape index: {1}]
  %4 = xla_tuple %s2, %s3
  %s5 = sld [smem:[#allocation0]]
  $region57: #{lovasz_loss.2} parent=0
    _
  %s7 = ssub.s32 1, %s5
  %s8 = scalar_select 0, %s7, %s5
  loop: start=0, step=1, limit=4
  $region2: #{lovasz_loss.2} parent=0 // loop_pre_header
    _
  $region3: #{lovasz_loss.2} parent=0 // loop_header
    %s10 = sphi 0, %s14
    %p11 = scmp.ge.s32.totalorder %s10, 4
    %s17 = sphi 0, %s29
    %s18 = sphi 0, %s25
    %s19 = sphi 0, %s17
    %s20 = sphi 0, %s18
    %s21 = sphi 0, %s19
    %s22 = sphi 0, %s20
    %s34 = sphi 0, %s36
    %s37 = sphi 0, %s34
    %s38 = sphi 0, %s37
    %s54 = sphi 0, %s38
    %s62 = sphi 0, %s64
    %s65 = sphi 0, %s62
    %s66 = sphi 0, %s65
    %s82 = sphi 0, %s66
    %s90 = sphi 0, %s92
    %s93 = sphi 0, %s90
    %s94 = sphi 0, %s93
    %s110 = sphi 0, %s94
    %s116 = sphi 0, %s118
    %s119 = sphi 0, %s116
    %s120 = sphi 0, %s119
    %s136 = sphi 0, %s120
  $region4: #{lovasz_loss.2} parent=0 // loop_header_branch
    %13 = sbr.rel (%p11) target = $region8
  $region5: #{lovasz_loss.2} parent=0 // loop_body
    %s15 = ssub.s32 %s10, 1
    %s16 = ssub.s32 %s10, 2
    %s23 = sadd.s32 1, %s18
    %p24 = scmp.ge.s32.totalorder %s23, 1
    %s25 = scalar_select %p24, 0, %s23
    %s26 = sadd.s32 1, %s17
    %s27 = scalar_select %p24, %s26, %s17
    %p28 = scmp.ge.s32.totalorder %s27, 2
    %s29 = scalar_select %p28, 0, %s27
    %s30 = ssub.s32 %s17, %s29
    %s31 = ssub.s32 %s18, %s25
    %s32 = sor.u32 %s30, %s31
    %p33 = scmp.eq.s32.totalorder %s32, 0
    %s35 = sadd.s32 %s34, 1
    %s36 = scalar_select %p33, %s34, %s35
    %p39 = pneg %p33
    %p40 = scmp.eq.s32.totalorder %s10, 1
    %p41 = por %p39, %p40
    %p42 = scmp.ne.s32.totalorder %s34, %s37
    %p43 = scmp.eq.s32.totalorder %s10, 0
    %p44 = por %p42, %p43
    %p45 = scmp.ne.s32.totalorder %s34, %s37
    %p46 = scmp.eq.s32.totalorder %s15, 1
    %p47 = por %p45, %p46
    %p48 = scmp.ne.s32.totalorder %s37, %s38
    %p49 = scmp.eq.s32.totalorder %s15, 0
    %p50 = por %p48, %p49
    %p51 = scmp.ne.s32.totalorder %s37, %s38
    %p52 = scmp.eq.s32.totalorder %s16, 1
    %p53 = por %p51, %p52
    %p55 = scmp.ne.s32.totalorder %s38, %s54
    %p56 = scmp.eq.s32.totalorder %s16, 0
    %p57 = por %p55, %p56
    %s58 = ssub.s32 %s17, %s29
    %s59 = ssub.s32 %s18, %s25
    %s60 = sor.u32 %s58, %s59
    %p61 = scmp.eq.s32.totalorder %s60, 0
    %s63 = sadd.s32 %s62, 1
    %s64 = scalar_select %p61, %s62, %s63
    %p67 = pneg %p61
    %p68 = scmp.eq.s32.totalorder %s10, 1
    %p69 = por %p67, %p68
    %p70 = scmp.ne.s32.totalorder %s62, %s65
    %p71 = scmp.eq.s32.totalorder %s10, 0
    %p72 = por %p70, %p71
    %p73 = scmp.ne.s32.totalorder %s62, %s65
    %p74 = scmp.eq.s32.totalorder %s15, 1
    %p75 = por %p73, %p74
    %p76 = scmp.ne.s32.totalorder %s65, %s66
    %p77 = scmp.eq.s32.totalorder %s15, 0
    %p78 = por %p76, %p77
    %p79 = scmp.ne.s32.totalorder %s65, %s66
    %p80 = scmp.eq.s32.totalorder %s16, 1
    %p81 = por %p79, %p80
    %p83 = scmp.ne.s32.totalorder %s66, %s82
    %p84 = scmp.eq.s32.totalorder %s16, 0
    %p85 = por %p83, %p84
    %s86 = ssub.s32 %s17, %s29
    %s87 = ssub.s32 %s18, %s25
    %s88 = sor.u32 %s86, %s87
    %p89 = scmp.eq.s32.totalorder %s88, 0
    %s91 = sadd.s32 %s90, 1
    %s92 = scalar_select %p89, %s90, %s91
    %p95 = pneg %p89
    %p96 = scmp.eq.s32.totalorder %s10, 1
    %p97 = por %p95, %p96
    %p98 = scmp.ne.s32.totalorder %s90, %s93
    %p99 = scmp.eq.s32.totalorder %s10, 0
    %p100 = por %p98, %p99
    %p101 = scmp.ne.s32.totalorder %s90, %s93
    %p102 = scmp.eq.s32.totalorder %s15, 1
    %p103 = por %p101, %p102
    %p104 = scmp.ne.s32.totalorder %s93, %s94
    %p105 = scmp.eq.s32.totalorder %s15, 0
    %p106 = por %p104, %p105
    %p107 = scmp.ne.s32.totalorder %s93, %s94
    %p108 = scmp.eq.s32.totalorder %s16, 1
    %p109 = por %p107, %p108
    %p111 = scmp.ne.s32.totalorder %s94, %s110
    %p112 = scmp.eq.s32.totalorder %s16, 0
    %p113 = por %p111, %p112
    %s114 = ssub.s32 %s17, %s29
    %p115 = scmp.eq.s32.totalorder %s114, 0
    %s117 = sadd.s32 %s116, 1
    %s118 = scalar_select %p115, %s116, %s117
    %p121 = pneg %p115
    %p122 = scmp.eq.s32.totalorder %s10, 1
    %p123 = por %p121, %p122
    %p124 = scmp.ne.s32.totalorder %s116, %s119
    %p125 = scmp.eq.s32.totalorder %s10, 0
    %p126 = por %p124, %p125
    %p127 = scmp.ne.s32.totalorder %s116, %s119
    %p128 = scmp.eq.s32.totalorder %s15, 1
    %p129 = por %p127, %p128
    %p130 = scmp.ne.s32.totalorder %s119, %s120
    %p131 = scmp.eq.s32.totalorder %s15, 0
    %p132 = por %p130, %p131
    %p133 = scmp.ne.s32.totalorder %s119, %s120
    %p134 = scmp.eq.s32.totalorder %s16, 1
    %p135 = por %p133, %p134
    %p137 = scmp.ne.s32.totalorder %s120, %s136
    %p138 = scmp.eq.s32.totalorder %s16, 0
    %p139 = por %p137, %p138
    %p140 = scmp.le.s32.totalorder 1, %s10
    %p141 = scmp.lt.s32.totalorder %s10, 3
    %p142 = pnand %p140, %p141
    %p143 = pneg %p142
    // Predicated region
    $region9: #{lovasz_loss.2} parent=5 // pred_check
      _
    $region10: #{lovasz_loss.2} parent=5 // pred_check_branch
      %145 = sbr.rel (%p142) target = $region12
    $region11: #{lovasz_loss.2} parent=5 // pred_region
      %s146 = ssub.s32 %s10, 1
    $region12: #{lovasz_loss.2} parent=5 // pred_fallthru
      _
    %p147 = scmp.lt.s32.totalorder %s10, 2
    // Predicated region
    $region13: #{lovasz_loss.2} parent=5 // pred_check
      %p148 = pneg %p147
    $region14: #{lovasz_loss.2} parent=5 // pred_check_branch
      %150 = sbr.rel (%p148) target = $region16
    $region15: #{lovasz_loss.2} parent=5 // pred_region
      // Predicated region
      $region17: #{lovasz_loss.2} parent=15 // pred_check
        %p151 = pneg %p44
      $region18: #{lovasz_loss.2} parent=15 // pred_check_branch
        %153 = sbr.rel (%p151) target = $region20
      $region19: #{lovasz_loss.2} parent=15 // pred_region
        %s154 = smul.u32 2, %s18
        %p155 = scmp.lt.s32.totalorder %s17, 1
        %s156 = scalar_select %p155, %s17, 1
        %p157 = scmp.lt.s32.totalorder %s154, 1
        %s158 = scalar_select %p157, %s154, 1
        %s159 = smul.addr %s156, 2
        %s160 = sadd.s32 %s158, %s159
        %s161 = smul.addr %s160, 4
        %s162 = scalar_lea.vmem %s0, %s161
        %s163 = smul.u32 2, %s18
      $region20: #{lovasz_loss.2} parent=15 // pred_fallthru
        _
      // Predicated region
      $region21: #{lovasz_loss.2} parent=15 // pred_check
        %p164 = pneg %p72
      $region22: #{lovasz_loss.2} parent=15 // pred_check_branch
        %166 = sbr.rel (%p164) target = $region24
      $region23: #{lovasz_loss.2} parent=15 // pred_region
        %s167 = smul.u32 2, %s18
        %p168 = scmp.lt.s32.totalorder %s17, 1
        %s169 = scalar_select %p168, %s17, 1
        %p170 = scmp.lt.s32.totalorder %s167, 1
        %s171 = scalar_select %p170, %s167, 1
        %s172 = smul.addr %s169, 2
        %s173 = sadd.s32 %s171, %s172
        %s174 = scalar_lea.vmem %s1, %s173
        %s175 = smul.u32 2, %s18
      $region24: #{lovasz_loss.2} parent=15 // pred_fallthru
        _
    $region16: #{lovasz_loss.2} parent=5 // pred_fallthru
      _
    %p176 = scmp.le.s32.totalorder 1, %s10
    %p177 = scmp.lt.s32.totalorder %s10, 3
    %p178 = pnand %p176, %p177
    %p179 = pneg %p178
    // Predicated region
    $region25: #{lovasz_loss.2} parent=5 // pred_check
      _
    $region26: #{lovasz_loss.2} parent=5 // pred_check_branch
      %181 = sbr.rel (%p178) target = $region28
    $region27: #{lovasz_loss.2} parent=5 // pred_region
      %s182 = ssub.s32 %s10, 1
      %s183 = smul.u32 2, %s20
      %p184 = scmp.lt.s32.totalorder %s19, 1
      %s185 = scalar_select %p184, %s19, 1
      %p186 = scmp.lt.s32.totalorder %s183, 1
      %s187 = scalar_select %p186, %s183, 1
      %s188 = smul.addr %s185, 2
      %s189 = sadd.s32 %s187, %s188
      %s190 = smul.addr %s189, 4
      %s191 = scalar_lea.vmem %s0, %s190
      %p192 = pneg %p50
      %p193 = pneg %p47
      %s194 = smul.u32 2, %s20
      %p195 = scmp.lt.s32.totalorder %s19, 1
      %s196 = scalar_select %p195, %s19, 1
      %p197 = scmp.lt.s32.totalorder %s194, 1
      %s198 = scalar_select %p197, %s194, 1
      %s199 = smul.addr %s196, 2
      %s200 = sadd.s32 %s198, %s199
      %s201 = scalar_lea.vmem %s1, %s200
      %p202 = pneg %p78
      %p203 = pneg %p75
      %p204 = pneg %p106
      %p205 = pneg %p103
      %s206 = smul.u32 2, %s20
      %p207 = scmp.lt.s32.totalorder %s19, 1
      %s208 = scalar_select %p207, %s19, 1
      %p209 = scmp.lt.s32.totalorder %s206, 1
      %s210 = scalar_select %p209, %s206, 1
      %s211 = smul.addr %s208, 2
      %s212 = sadd.s32 %s210, %s211
      %s213 = smul.addr %s212, 4
      %s214 = scalar_lea.vmem %s2, %s213
      %p215 = pneg %p132
      %p216 = pneg %p129
      %p217 = scmp.lt.s32.totalorder %s19, 1
      %s218 = scalar_select %p217, %s19, 1
      %s219 = smul.addr %s218, 4
      %s220 = scalar_lea.vmem %s3, %s219
      %s221 = smul.u32 2, %s20
      %p222 = scmp.lt.s32.totalorder %s19, 1
      %s223 = scalar_select %p222, %s19, 1
      %p224 = scmp.lt.s32.totalorder %s221, 1
      %s225 = scalar_select %p224, %s221, 1
      %s226 = smul.addr %s223, 2
      %s227 = sadd.s32 %s225, %s226
      %s228 = smul.addr %s227, 4
      %s229 = scalar_lea.vmem %s0, %s228
      %s230 = smul.u32 2, %s20
      %s231 = smul.u32 2, %s20
      %p232 = scmp.lt.s32.totalorder %s19, 1
      %s233 = scalar_select %p232, %s19, 1
      %p234 = scmp.lt.s32.totalorder %s231, 1
      %s235 = scalar_select %p234, %s231, 1
      %s236 = smul.addr %s233, 2
      %s237 = sadd.s32 %s235, %s236
      %s238 = scalar_lea.vmem %s1, %s237
      %s239 = smul.u32 2, %s20
      %s240 = smul.u32 2, %s20
      %p241 = scmp.lt.s32.totalorder %s19, 1
      %s242 = scalar_select %p241, %s19, 1
      %p243 = scmp.lt.s32.totalorder %s240, 1
      %s244 = scalar_select %p243, %s240, 1
      %s245 = smul.addr %s242, 2
      %s246 = sadd.s32 %s244, %s245
      %s247 = smul.addr %s246, 4
      %s248 = scalar_lea.vmem %s2, %s247
      %s249 = smul.u32 2, %s20
      %p250 = scmp.lt.s32.totalorder %s19, 1
      %s251 = scalar_select %p250, %s19, 1
      %s252 = smul.addr %s251, 4
      %s253 = scalar_lea.vmem %s3, %s252
      %p254 = scmp.eq.s32.totalorder %s20, 0
      // Predicated region
      $region29: #{lovasz_loss.2} parent=27 // pred_check
        %p255 = pneg %p254
      $region30: #{lovasz_loss.2} parent=27 // pred_check_branch
        %257 = sbr.rel (%p255) target = $region32
      $region31: #{lovasz_loss.2} parent=27 // pred_region
        %vm258 = vcmask 3072
        %259 = vst.msk [vmem:[#allocation2] sm:$0xf] %vm258, 0.0
      $region32: #{lovasz_loss.2} parent=27 // pred_fallthru
        _
      %v260 = vld [vmem:[%s229] sm:$0xff]
      %v261 = vld [vmem:[%s238] sm:$0x3]
      %v263 = vcombine.high %v260, %v260
      %vm265 = vcmask 1043456
      %v266 = vsel %vm265, %v260, -inf
      %v267 = vrot.slane %v266, 4
      %v268 = vmax.f32 %v266, %v267
      %v269 = vrot.slane %v268, 2
      %v270 = vmax.f32 %v268, %v269
      %v271 = vrot.slane %v270, 1
      %v272 = vmax.f32 %v270, %v271
      %v273 = vsel %vm265, %v263, -inf
      %v274 = vrot.slane %v273, 4
      %v275 = vmax.f32 %v273, %v274
      %v276 = vrot.slane %v275, 2
      %v277 = vmax.f32 %v275, %v276
      %v278 = vrot.slane %v277, 1
      %v279 = vmax.f32 %v277, %v278
      %v282 = vcombine.low %v272, %v279
      %v284 = vsub.f32 %v260, %v282
      %v285 = vmul.f32 %v284, 1.442695
      %v286 = vpow.pop %v285
      %v288 = vcombine.high %v286, %v286
      %v290 = vsel %vm265, %v286, 0.0
      %v291 = vrot.slane %v290, 4
      %v292 = vadd.f32 %v290, %v291
      %v293 = vrot.slane %v292, 2
      %v294 = vadd.f32 %v292, %v293
      %v295 = vrot.slane %v294, 1
      %v296 = vadd.f32 %v294, %v295
      %v297 = vsel %vm265, %v288, 0.0
      %v298 = vrot.slane %v297, 4
      %v299 = vadd.f32 %v297, %v298
      %v300 = vrot.slane %v299, 2
      %v301 = vadd.f32 %v299, %v300
      %v302 = vrot.slane %v301, 1
      %v303 = vadd.f32 %v301, %v302
      %v304 = vrcp.pop %v296
      %v305 = vmul.f32 1.0, %v304
      %v306 = vrcp.pop %v303
      %v307 = vmul.f32 1.0, %v306
      %v310 = vcombine.low %v305, %v307
      %v312 = vmul.f32 %v286, %v310
      %v313 = vlaneseq
      %v314 = vshrl.u32 %v313, 7
      %v315 = vlaneseq
      %v316 = vshrl.u32 %v315, 7
      %v317 = vsub.s32 0, %v316
      %v318 = vrot.slane %v261, %v317
      %v319 = vlaneseq
      %v320 = vshrl.u32 %v319, 7
      %v321 = vsub.s32 1, %v320
      %v322 = vrot.slane %v261, %v321
      %vm323 = vcmp.eq.s32.totalorder %v318, %v314
      %vm324 = vcmp.eq.s32.totalorder %v322, %v314
      %v325 = vsel %vm323, 1, 0
      %v326 = vsel %vm324, 1, 0
      %v327 = vcvt.s32.f32 %v325
      %v328 = vcvt.s32.f32 %v326
      %v330 = vcombine.high %v312, %v312
      %v332 = vsub.f32 %v327, %v312
      %v333 = vsub.f32 %v328, %v330
      %v334 = vand.u32 2147483647, %v332
      %v335 = vand.u32 2147483647, %v333
      %v336 = vmax.f32 %v334, 1e-30
      %v337 = vmax.f32 %v335, 1e-30
      %v340 = vand.u32 %v336, 4294967294
      %v341 = vand.u32 %v337, 4294967294
      %v342 = vor.u32 %v340, %v325
      %v343 = vor.u32 %v341, %v326
      %v344 = vcombine.low %v342, %v343
      %346 = vst [vmem:[%s248] sm:$0xff] %v344
      %v347 = vld [vmem:[#allocation2] sm:$0xf]
      %v348 = vsel %vm265, %v327, 0.0
      %v349 = vsel %vm265, %v328, 0.0
      %v350 = vadd.f32 %v348, %v349
      %351 = vadd.xlane.f32.xlu0 %v350
      %v352 = vpop.xlane.xlu0 %351
      %v353 = vadd.f32 %v347, %v352
      %vm354 = vcmask 3072
      %355 = vst.msk [vmem:[#allocation2] sm:$0xf] %vm354, %v353
      // Predicated region
      $region33: #{lovasz_loss.2} parent=27 // pred_check
        %p356 = pneg %p254
      $region34: #{lovasz_loss.2} parent=27 // pred_check_branch
        %358 = sbr.rel (%p356) target = $region36
      $region35: #{lovasz_loss.2} parent=27 // pred_region
        %v359 = vld [vmem:[#allocation2] sm:$0xf]
        %360 = vst.msk [vmem:[%s253] sm:$0xf] %vm354, %v359
      $region36: #{lovasz_loss.2} parent=27 // pred_fallthru
        _
      %s361 = smul.u32 2, %s20
      %p362 = scmp.lt.s32.totalorder %s19, 1
      %s363 = scalar_select %p362, %s19, 1
      %p364 = scmp.lt.s32.totalorder %s361, 1
      %s365 = scalar_select %p364, %s361, 1
      %s366 = smul.addr %s363, 2
      %s367 = sadd.s32 %s365, %s366
      %s368 = smul.addr %s367, 4
      %s369 = scalar_lea.vmem %s2, %s368
      %p370 = scmp.lt.s32.totalorder %s19, 1
      %s371 = scalar_select %p370, %s19, 1
      %s372 = smul.addr %s371, 4
      %s373 = scalar_lea.vmem %s3, %s372
      // Predicated region
      $region37: #{lovasz_loss.2} parent=27 // pred_check
        %p374 = pneg %p103
      $region38: #{lovasz_loss.2} parent=27 // pred_check_branch
        %376 = sbr.rel (%p374) target = $region40
      $region39: #{lovasz_loss.2} parent=27 // pred_region
        %s377 = smul.u32 2, %s20
      $region40: #{lovasz_loss.2} parent=27 // pred_fallthru
        _
      // Predicated region
      $region41: #{lovasz_loss.2} parent=27 // pred_check
        %p378 = pneg %p129
      $region42: #{lovasz_loss.2} parent=27 // pred_check_branch
        %380 = sbr.rel (%p378) target = $region44
      $region43: #{lovasz_loss.2} parent=27 // pred_region
        _
      $region44: #{lovasz_loss.2} parent=27 // pred_fallthru
        _
    $region28: #{lovasz_loss.2} parent=5 // pred_fallthru
      _
    %p381 = scmp.le.s32.totalorder 2, %s10
    // Predicated region
    $region45: #{lovasz_loss.2} parent=5 // pred_check
      %p382 = pneg %p381
    $region46: #{lovasz_loss.2} parent=5 // pred_check_branch
      %384 = sbr.rel (%p382) target = $region48
    $region47: #{lovasz_loss.2} parent=5 // pred_region
      %s385 = ssub.s32 %s10, 2
      // Predicated region
      $region49: #{lovasz_loss.2} parent=47 // pred_check
        %p386 = pneg %p109
      $region50: #{lovasz_loss.2} parent=47 // pred_check_branch
        %388 = sbr.rel (%p386) target = $region52
      $region51: #{lovasz_loss.2} parent=47 // pred_region
        %s389 = smul.u32 2, %s22
        %p390 = scmp.lt.s32.totalorder %s21, 1
        %s391 = scalar_select %p390, %s21, 1
        %p392 = scmp.lt.s32.totalorder %s389, 1
        %s393 = scalar_select %p392, %s389, 1
        %s394 = smul.addr %s391, 2
        %s395 = sadd.s32 %s393, %s394
        %s396 = smul.addr %s395, 4
        %s397 = scalar_lea.vmem %s2, %s396
      $region52: #{lovasz_loss.2} parent=47 // pred_fallthru
        _
      // Predicated region
      $region53: #{lovasz_loss.2} parent=47 // pred_check
        %p398 = pneg %p135
      $region54: #{lovasz_loss.2} parent=47 // pred_check_branch
        %400 = sbr.rel (%p398) target = $region56
      $region55: #{lovasz_loss.2} parent=47 // pred_region
        %p401 = scmp.lt.s32.totalorder %s21, 1
        %s402 = scalar_select %p401, %s21, 1
        %s403 = smul.addr %s402, 4
        %s404 = scalar_lea.vmem %s3, %s403
      $region56: #{lovasz_loss.2} parent=47 // pred_fallthru
        _
    $region48: #{lovasz_loss.2} parent=5 // pred_fallthru
      _
  $region6: #{lovasz_loss.2} parent=0 // loop_footer
    %s14 = sadd.s32 1, %s10
  $region7: #{lovasz_loss.2} parent=0 // loop_footer_branch
    %9 = sbr.rel target = $region3
  $region8: #{lovasz_loss.2} parent=0 // loop_exit
    _

// kernel: lovasz_loss.3
$region0: #{lovasz_loss.3}
  #allocation0 [shape = 'u32[]', space=smem, size = 0x4, offset = 0x4, fixed_abs, tag = 'smem constant byte address 0x4 - core index']
  #allocation1 [shape = 'u32[144,128]{1,0:T(1,128)}', space=vmem, size = 0x12000, scoped, tag = 'internal scratch']
  #allocation2 [shape = 'bf16[256,256]{1,0:T(8,128)(2,1)}', space=vmem, size = 0x20000, scoped, tag = 'scratch operand']
  #allocation3 [shape = 'f32[8,1]{1,0:T(8,128)}', space=vmem, size = 0x1000, scoped, tag = 'scratch operand']
  #allocation4 [shape = 'f32[8,1]{1,0:T(8,128)}', space=vmem, size = 0x1000, scoped, tag = 'scratch operand']
  %s0 = inlined_call_operand.vmem [shape: f32[8,256], index: 0, kind: input, shape index: {}]
  %s1 = inlined_call_operand.vmem [shape: f32[8,1], index: 1, kind: input, shape index: {}]
  %s2 = inlined_call_operand.vmem [shape: f32[8,1], index: 2, kind: output, shape index: {}]
  %s3 = sld [smem:[#allocation0]]
  $region26: #{lovasz_loss.3} parent=0
    _
  %s5 = ssub.s32 1, %s3
  %s6 = scalar_select 0, %s5, %s3
  // Predicated region
  $region2: #{lovasz_loss.3} parent=0 // pred_check
    _
  $region3: #{lovasz_loss.3} parent=0 // pred_check_branch
    %8 = sbr.rel (0) target = $region5
  $region4: #{lovasz_loss.3} parent=0 // pred_region
    _
  $region5: #{lovasz_loss.3} parent=0 // pred_fallthru
    _
  // Predicated region
  $region6: #{lovasz_loss.3} parent=0 // pred_check
    _
  $region7: #{lovasz_loss.3} parent=0 // pred_check_branch
    %10 = sbr.rel (0) target = $region9
  $region8: #{lovasz_loss.3} parent=0 // pred_region
    _
  $region9: #{lovasz_loss.3} parent=0 // pred_fallthru
    _
  %p11 = scmp.eq.s32.totalorder 0, 0
  // Predicated region
  $region10: #{lovasz_loss.3} parent=0 // pred_check
    %p12 = pneg %p11
  $region11: #{lovasz_loss.3} parent=0 // pred_check_branch
    %14 = sbr.rel (%p12) target = $region13
  $region12: #{lovasz_loss.3} parent=0 // pred_region
    %v15 = vlaneseq
    %v16 = vshrl.u32 %v15, 7
    %v17 = vadd.s32 %v16, 8
    %v18 = vadd.s32 %v16, 16
    %v19 = vadd.s32 %v16, 24
    %v20 = vadd.s32 %v16, 32
    %v21 = vadd.s32 %v16, 40
    %v22 = vadd.s32 %v16, 48
    %v23 = vadd.s32 %v16, 56
    %v24 = vadd.s32 %v16, 64
    %v25 = vadd.s32 %v16, 72
    %v26 = vadd.s32 %v16, 80
    %v27 = vadd.s32 %v16, 88
    %v28 = vadd.s32 %v16, 96
    %v29 = vadd.s32 %v16, 104
    %v30 = vadd.s32 %v16, 112
    %v31 = vadd.s32 %v16, 120
    %v32 = vadd.s32 %v16, 128
    %v33 = vadd.s32 %v16, 136
    %v34 = vadd.s32 %v16, 144
    %v35 = vadd.s32 %v16, 152
    %v36 = vadd.s32 %v16, 160
    %v37 = vadd.s32 %v16, 168
    %v38 = vadd.s32 %v16, 176
    %v39 = vadd.s32 %v16, 184
    %v40 = vadd.s32 %v16, 192
    %v41 = vadd.s32 %v16, 200
    %v42 = vadd.s32 %v16, 208
    %v43 = vadd.s32 %v16, 216
    %v44 = vadd.s32 %v16, 224
    %v45 = vadd.s32 %v16, 232
    %v46 = vadd.s32 %v16, 240
    %v47 = vadd.s32 %v16, 248
    %v48 = vlaneseq
    %v49 = vand.u32 %v48, 127
    %v50 = vadd.s32 %v49, 128
    %vm51 = vcmp.le.s32.totalorder %v16, %v49
    %vm52 = vcmp.le.s32.totalorder %v16, %v50
    %vm53 = vcmp.le.s32.totalorder %v17, %v49
    %vm54 = vcmp.le.s32.totalorder %v17, %v50
    %vm55 = vcmp.le.s32.totalorder %v18, %v49
    %vm56 = vcmp.le.s32.totalorder %v18, %v50
    %vm57 = vcmp.le.s32.totalorder %v19, %v49
    %vm58 = vcmp.le.s32.totalorder %v19, %v50
    %vm59 = vcmp.le.s32.totalorder %v20, %v49
    %vm60 = vcmp.le.s32.totalorder %v20, %v50
    %vm61 = vcmp.le.s32.totalorder %v21, %v49
    %vm62 = vcmp.le.s32.totalorder %v21, %v50
    %vm63 = vcmp.le.s32.totalorder %v22, %v49
    %vm64 = vcmp.le.s32.totalorder %v22, %v50
    %vm65 = vcmp.le.s32.totalorder %v23, %v49
    %vm66 = vcmp.le.s32.totalorder %v23, %v50
    %vm67 = vcmp.le.s32.totalorder %v24, %v49
    %vm68 = vcmp.le.s32.totalorder %v24, %v50
    %vm69 = vcmp.le.s32.totalorder %v25, %v49
    %vm70 = vcmp.le.s32.totalorder %v25, %v50
    %vm71 = vcmp.le.s32.totalorder %v26, %v49
    %vm72 = vcmp.le.s32.totalorder %v26, %v50
    %vm73 = vcmp.le.s32.totalorder %v27, %v49
    %vm74 = vcmp.le.s32.totalorder %v27, %v50
    %vm75 = vcmp.le.s32.totalorder %v28, %v49
    %vm76 = vcmp.le.s32.totalorder %v28, %v50
    %vm77 = vcmp.le.s32.totalorder %v29, %v49
    %vm78 = vcmp.le.s32.totalorder %v29, %v50
    %vm79 = vcmp.le.s32.totalorder %v30, %v49
    %vm80 = vcmp.le.s32.totalorder %v30, %v50
    %vm81 = vcmp.le.s32.totalorder %v31, %v49
    %vm82 = vcmp.le.s32.totalorder %v31, %v50
    %vm83 = vcmp.le.s32.totalorder %v32, %v49
    %vm84 = vcmp.le.s32.totalorder %v32, %v50
    %vm85 = vcmp.le.s32.totalorder %v33, %v49
    %vm86 = vcmp.le.s32.totalorder %v33, %v50
    %vm87 = vcmp.le.s32.totalorder %v34, %v49
    %vm88 = vcmp.le.s32.totalorder %v34, %v50
    %vm89 = vcmp.le.s32.totalorder %v35, %v49
    %vm90 = vcmp.le.s32.totalorder %v35, %v50
    %vm91 = vcmp.le.s32.totalorder %v36, %v49
    %vm92 = vcmp.le.s32.totalorder %v36, %v50
    %vm93 = vcmp.le.s32.totalorder %v37, %v49
    %vm94 = vcmp.le.s32.totalorder %v37, %v50
    %vm95 = vcmp.le.s32.totalorder %v38, %v49
    %vm96 = vcmp.le.s32.totalorder %v38, %v50
    %vm97 = vcmp.le.s32.totalorder %v39, %v49
    %vm98 = vcmp.le.s32.totalorder %v39, %v50
    %vm99 = vcmp.le.s32.totalorder %v40, %v49
    %vm100 = vcmp.le.s32.totalorder %v40, %v50
    %vm101 = vcmp.le.s32.totalorder %v41, %v49
    %vm102 = vcmp.le.s32.totalorder %v41, %v50
    %vm103 = vcmp.le.s32.totalorder %v42, %v49
    %vm104 = vcmp.le.s32.totalorder %v42, %v50
    %vm105 = vcmp.le.s32.totalorder %v43, %v49
    %vm106 = vcmp.le.s32.totalorder %v43, %v50
    %vm107 = vcmp.le.s32.totalorder %v44, %v49
    %vm108 = vcmp.le.s32.totalorder %v44, %v50
    %vm109 = vcmp.le.s32.totalorder %v45, %v49
    %vm110 = vcmp.le.s32.totalorder %v45, %v50
    %vm111 = vcmp.le.s32.totalorder %v46, %v49
    %vm112 = vcmp.le.s32.totalorder %v46, %v50
    %vm113 = vcmp.le.s32.totalorder %v47, %v49
    %vm114 = vcmp.le.s32.totalorder %v47, %v50
    %v115 = vsel %vm51, 1, 0
    %v116 = vsel %vm52, 1, 0
    %v117 = vsel %vm53, 1, 0
    %v118 = vsel %vm54, 1, 0
    %v119 = vsel %vm55, 1, 0
    %v120 = vsel %vm56, 1, 0
    %v121 = vsel %vm57, 1, 0
    %v122 = vsel %vm58, 1, 0
    %v123 = vsel %vm59, 1, 0
    %v124 = vsel %vm60, 1, 0
    %v125 = vsel %vm61, 1, 0
    %v126 = vsel %vm62, 1, 0
    %v127 = vsel %vm63, 1, 0
    %v128 = vsel %vm64, 1, 0
    %v129 = vsel %vm65, 1, 0
    %v130 = vsel %vm66, 1, 0
    %v131 = vsel %vm67, 1, 0
    %v132 = vsel %vm68, 1, 0
    %v133 = vsel %vm69, 1, 0
    %v134 = vsel %vm70, 1, 0
    %v135 = vsel %vm71, 1, 0
    %v136 = vsel %vm72, 1, 0
    %v137 = vsel %vm73, 1, 0
    %v138 = vsel %vm74, 1, 0
    %v139 = vsel %vm75, 1, 0
    %v140 = vsel %vm76, 1, 0
    %v141 = vsel %vm77, 1, 0
    %v142 = vsel %vm78, 1, 0
    %v143 = vsel %vm79, 1, 0
    %v144 = vsel %vm80, 1, 0
    %v145 = vsel %vm81, 1, 0
    %v146 = vsel %vm82, 1, 0
    %v147 = vsel %vm83, 1, 0
    %v148 = vsel %vm84, 1, 0
    %v149 = vsel %vm85, 1, 0
    %v150 = vsel %vm86, 1, 0
    %v151 = vsel %vm87, 1, 0
    %v152 = vsel %vm88, 1, 0
    %v153 = vsel %vm89, 1, 0
    %v154 = vsel %vm90, 1, 0
    %v155 = vsel %vm91, 1, 0
    %v156 = vsel %vm92, 1, 0
    %v157 = vsel %vm93, 1, 0
    %v158 = vsel %vm94, 1, 0
    %v159 = vsel %vm95, 1, 0
    %v160 = vsel %vm96, 1, 0
    %v161 = vsel %vm97, 1, 0
    %v162 = vsel %vm98, 1, 0
    %v163 = vsel %vm99, 1, 0
    %v164 = vsel %vm100, 1, 0
    %v165 = vsel %vm101, 1, 0
    %v166 = vsel %vm102, 1, 0
    %v167 = vsel %vm103, 1, 0
    %v168 = vsel %vm104, 1, 0
    %v169 = vsel %vm105, 1, 0
    %v170 = vsel %vm106, 1, 0
    %v171 = vsel %vm107, 1, 0
    %v172 = vsel %vm108, 1, 0
    %v173 = vsel %vm109, 1, 0
    %v174 = vsel %vm110, 1, 0
    %v175 = vsel %vm111, 1, 0
    %v176 = vsel %vm112, 1, 0
    %v177 = vsel %vm113, 1, 0
    %v178 = vsel %vm114, 1, 0
    %v179 = vcvt.s32.f32 %v115
    %v180 = vcvt.s32.f32 %v116
    %v181 = vcvt.s32.f32 %v117
    %v182 = vcvt.s32.f32 %v118
    %v183 = vcvt.s32.f32 %v119
    %v184 = vcvt.s32.f32 %v120
    %v185 = vcvt.s32.f32 %v121
    %v186 = vcvt.s32.f32 %v122
    %v187 = vcvt.s32.f32 %v123
    %v188 = vcvt.s32.f32 %v124
    %v189 = vcvt.s32.f32 %v125
    %v190 = vcvt.s32.f32 %v126
    %v191 = vcvt.s32.f32 %v127
    %v192 = vcvt.s32.f32 %v128
    %v193 = vcvt.s32.f32 %v129
    %v194 = vcvt.s32.f32 %v130
    %v195 = vcvt.s32.f32 %v131
    %v196 = vcvt.s32.f32 %v132
    %v197 = vcvt.s32.f32 %v133
    %v198 = vcvt.s32.f32 %v134
    %v199 = vcvt.s32.f32 %v135
    %v200 = vcvt.s32.f32 %v136
    %v201 = vcvt.s32.f32 %v137
    %v202 = vcvt.s32.f32 %v138
    %v203 = vcvt.s32.f32 %v139
    %v204 = vcvt.s32.f32 %v140
    %v205 = vcvt.s32.f32 %v141
    %v206 = vcvt.s32.f32 %v142
    %v207 = vcvt.s32.f32 %v143
    %v208 = vcvt.s32.f32 %v144
    %v209 = vcvt.s32.f32 %v145
    %v210 = vcvt.s32.f32 %v146
    %v211 = vcvt.s32.f32 %v147
    %v212 = vcvt.s32.f32 %v148
    %v213 = vcvt.s32.f32 %v149
    %v214 = vcvt.s32.f32 %v150
    %v215 = vcvt.s32.f32 %v151
    %v216 = vcvt.s32.f32 %v152
    %v217 = vcvt.s32.f32 %v153
    %v218 = vcvt.s32.f32 %v154
    %v219 = vcvt.s32.f32 %v155
    %v220 = vcvt.s32.f32 %v156
    %v221 = vcvt.s32.f32 %v157
    %v222 = vcvt.s32.f32 %v158
    %v223 = vcvt.s32.f32 %v159
    %v224 = vcvt.s32.f32 %v160
    %v225 = vcvt.s32.f32 %v161
    %v226 = vcvt.s32.f32 %v162
    %v227 = vcvt.s32.f32 %v163
    %v228 = vcvt.s32.f32 %v164
    %v229 = vcvt.s32.f32 %v165
    %v230 = vcvt.s32.f32 %v166
    %v231 = vcvt.s32.f32 %v167
    %v232 = vcvt.s32.f32 %v168
    %v233 = vcvt.s32.f32 %v169
    %v234 = vcvt.s32.f32 %v170
    %v235 = vcvt.s32.f32 %v171
    %v236 = vcvt.s32.f32 %v172
    %v237 = vcvt.s32.f32 %v173
    %v238 = vcvt.s32.f32 %v174
    %v239 = vcvt.s32.f32 %v175
    %v240 = vcvt.s32.f32 %v176
    %v241 = vcvt.s32.f32 %v177
    %v242 = vcvt.s32.f32 %v178
    %v243 = vpack.c.bf16 %v181, %v179
    %v244 = vpack.c.bf16 %v182, %v180
    %v245 = vpack.c.bf16 %v185, %v183
    %v246 = vpack.c.bf16 %v186, %v184
    %v247 = vpack.c.bf16 %v189, %v187
    %v248 = vpack.c.bf16 %v190, %v188
    %v249 = vpack.c.bf16 %v193, %v191
    %v250 = vpack.c.bf16 %v194, %v192
    %v251 = vpack.c.bf16 %v197, %v195
    %v252 = vpack.c.bf16 %v198, %v196
    %v253 = vpack.c.bf16 %v201, %v199
    %v254 = vpack.c.bf16 %v202, %v200
    %v255 = vpack.c.bf16 %v205, %v203
    %v256 = vpack.c.bf16 %v206, %v204
    %v257 = vpack.c.bf16 %v209, %v207
    %v258 = vpack.c.bf16 %v210, %v208
    %v259 = vpack.c.bf16 %v213, %v211
    %v260 = vpack.c.bf16 %v214, %v212
    %v261 = vpack.c.bf16 %v217, %v215
    %v262 = vpack.c.bf16 %v218, %v216
    %v263 = vpack.c.bf16 %v221, %v219
    %v264 = vpack.c.bf16 %v222, %v220
    %v265 = vpack.c.bf16 %v225, %v223
    %v266 = vpack.c.bf16 %v226, %v224
    %v267 = vpack.c.bf16 %v229, %v227
    %v268 = vpack.c.bf16 %v230, %v228
    %v269 = vpack.c.bf16 %v233, %v231
    %v270 = vpack.c.bf16 %v234, %v232
    %v271 = vpack.c.bf16 %v237, %v235
    %v272 = vpack.c.bf16 %v238, %v236
    %v273 = vpack.c.bf16 %v241, %v239
    %v274 = vpack.c.bf16 %v242, %v240
    %v307 = vunpack.c.l.b16 %v243
    %v308 = vunpack.c.l.b16 %v244
    %v309 = vunpack.c.h.b16 %v243
    %v310 = vunpack.c.h.b16 %v244
    %v311 = vunpack.c.l.b16 %v245
    %v312 = vunpack.c.l.b16 %v246
    %v313 = vunpack.c.h.b16 %v245
    %v314 = vunpack.c.h.b16 %v246
    %v315 = vunpack.c.l.b16 %v247
    %v316 = vunpack.c.l.b16 %v248
    %v317 = vunpack.c.h.b16 %v247
    %v318 = vunpack.c.h.b16 %v248
    %v319 = vunpack.c.l.b16 %v249
    %v320 = vunpack.c.l.b16 %v250
    %v321 = vunpack.c.h.b16 %v249
    %v322 = vunpack.c.h.b16 %v250
    %v323 = vunpack.c.l.b16 %v251
    %v324 = vunpack.c.l.b16 %v252
    %v325 = vunpack.c.h.b16 %v251
    %v326 = vunpack.c.h.b16 %v252
    %v327 = vunpack.c.l.b16 %v253
    %v328 = vunpack.c.l.b16 %v254
    %v329 = vunpack.c.h.b16 %v253
    %v330 = vunpack.c.h.b16 %v254
    %v331 = vunpack.c.l.b16 %v255
    %v332 = vunpack.c.l.b16 %v256
    %v333 = vunpack.c.h.b16 %v255
    %v334 = vunpack.c.h.b16 %v256
    %v335 = vunpack.c.l.b16 %v257
    %v336 = vunpack.c.l.b16 %v258
    %v337 = vunpack.c.h.b16 %v257
    %v338 = vunpack.c.h.b16 %v258
    %v339 = vunpack.c.l.b16 %v259
    %v340 = vunpack.c.l.b16 %v260
    %v341 = vunpack.c.h.b16 %v259
    %v342 = vunpack.c.h.b16 %v260
    %v343 = vunpack.c.l.b16 %v261
    %v344 = vunpack.c.l.b16 %v262
    %v345 = vunpack.c.h.b16 %v261
    %v346 = vunpack.c.h.b16 %v262
    %v347 = vunpack.c.l.b16 %v263
    %v348 = vunpack.c.l.b16 %v264
    %v349 = vunpack.c.h.b16 %v263
    %v350 = vunpack.c.h.b16 %v264
    %v351 = vunpack.c.l.b16 %v265
    %v352 = vunpack.c.l.b16 %v266
    %v353 = vunpack.c.h.b16 %v265
    %v354 = vunpack.c.h.b16 %v266
    %v355 = vunpack.c.l.b16 %v267
    %v356 = vunpack.c.l.b16 %v268
    %v357 = vunpack.c.h.b16 %v267
    %v358 = vunpack.c.h.b16 %v268
    %v359 = vunpack.c.l.b16 %v269
    %v360 = vunpack.c.l.b16 %v270
    %v361 = vunpack.c.h.b16 %v269
    %v362 = vunpack.c.h.b16 %v270
    %v363 = vunpack.c.l.b16 %v271
    %v364 = vunpack.c.l.b16 %v272
    %v365 = vunpack.c.h.b16 %v271
    %v366 = vunpack.c.h.b16 %v272
    %v367 = vunpack.c.l.b16 %v273
    %v368 = vunpack.c.l.b16 %v274
    %v369 = vunpack.c.h.b16 %v273
    %v370 = vunpack.c.h.b16 %v274
    %v371 = vpack.c.b16 %v308, %v307
    %v372 = vpack.c.b16 %v310, %v309
    %v373 = vpack.c.b16 %v312, %v311
    %v374 = vpack.c.b16 %v314, %v313
    %v375 = vpack.c.b16 %v316, %v315
    %v376 = vpack.c.b16 %v318, %v317
    %v377 = vpack.c.b16 %v320, %v319
    %v378 = vpack.c.b16 %v322, %v321
    %v379 = vpack.c.b16 %v324, %v323
    %v380 = vpack.c.b16 %v326, %v325
    %v381 = vpack.c.b16 %v328, %v327
    %v382 = vpack.c.b16 %v330, %v329
    %v383 = vpack.c.b16 %v332, %v331
    %v384 = vpack.c.b16 %v334, %v333
    %v385 = vpack.c.b16 %v336, %v335
    %v386 = vpack.c.b16 %v338, %v337
    %v387 = vpack.c.b16 %v340, %v339
    %v388 = vpack.c.b16 %v342, %v341
    %v389 = vpack.c.b16 %v344, %v343
    %v390 = vpack.c.b16 %v346, %v345
    %v391 = vpack.c.b16 %v348, %v347
    %v392 = vpack.c.b16 %v350, %v349
    %v393 = vpack.c.b16 %v352, %v351
    %v394 = vpack.c.b16 %v354, %v353
    %v395 = vpack.c.b16 %v356, %v355
    %v396 = vpack.c.b16 %v358, %v357
    %v397 = vpack.c.b16 %v360, %v359
    %v398 = vpack.c.b16 %v362, %v361
    %v399 = vpack.c.b16 %v364, %v363
    %v400 = vpack.c.b16 %v366, %v365
    %v401 = vpack.c.b16 %v368, %v367
    %v402 = vpack.c.b16 %v370, %v369
    %435 = vst [vmem:[#allocation2] sm:$0xff] %v371
    %436 = vst [vmem:[#allocation2 + $0x8] sm:$0xff] %v372
    %437 = vst [vmem:[#allocation2 + $0x10] sm:$0xff] %v373
    %438 = vst [vmem:[#allocation2 + $0x18] sm:$0xff] %v374
    %439 = vst [vmem:[#allocation2 + $0x20] sm:$0xff] %v375
    %440 = vst [vmem:[#allocation2 + $0x28] sm:$0xff] %v376
    %441 = vst [vmem:[#allocation2 + $0x30] sm:$0xff] %v377
    %442 = vst [vmem:[#allocation2 + $0x38] sm:$0xff] %v378
    %443 = vst [vmem:[#allocation2 + $0x40] sm:$0xff] %v379
    %444 = vst [vmem:[#allocation2 + $0x48] sm:$0xff] %v380
    %445 = vst [vmem:[#allocation2 + $0x50] sm:$0xff] %v381
    %446 = vst [vmem:[#allocation2 + $0x58] sm:$0xff] %v382
    %447 = vst [vmem:[#allocation2 + $0x60] sm:$0xff] %v383
    %448 = vst [vmem:[#allocation2 + $0x68] sm:$0xff] %v384
    %449 = vst [vmem:[#allocation2 + $0x70] sm:$0xff] %v385
    %450 = vst [vmem:[#allocation2 + $0x78] sm:$0xff] %v386
    %451 = vst [vmem:[#allocation2 + $0x80] sm:$0xff] %v387
    %452 = vst [vmem:[#allocation2 + $0x88] sm:$0xff] %v388
    %453 = vst [vmem:[#allocation2 + $0x90] sm:$0xff] %v389
    %454 = vst [vmem:[#allocation2 + $0x98] sm:$0xff] %v390
    %455 = vst [vmem:[#allocation2 + $0xa0] sm:$0xff] %v391
    %456 = vst [vmem:[#allocation2 + $0xa8] sm:$0xff] %v392
    %457 = vst [vmem:[#allocation2 + $0xb0] sm:$0xff] %v393
    %458 = vst [vmem:[#allocation2 + $0xb8] sm:$0xff] %v394
    %459 = vst [vmem:[#allocation2 + $0xc0] sm:$0xff] %v395
    %460 = vst [vmem:[#allocation2 + $0xc8] sm:$0xff] %v396
    %461 = vst [vmem:[#allocation2 + $0xd0] sm:$0xff] %v397
    %462 = vst [vmem:[#allocation2 + $0xd8] sm:$0xff] %v398
    %463 = vst [vmem:[#allocation2 + $0xe0] sm:$0xff] %v399
    %464 = vst [vmem:[#allocation2 + $0xe8] sm:$0xff] %v400
    %465 = vst [vmem:[#allocation2 + $0xf0] sm:$0xff] %v401
    %466 = vst [vmem:[#allocation2 + $0xf8] sm:$0xff] %v402
    %vm467 = vcmask 7168
    %468 = vst.msk [vmem:[#allocation3] sm:$0xff] %vm467, 0.0
    %469 = vst.msk [vmem:[#allocation4] sm:$0xff] %vm467, 0.0
  $region13: #{lovasz_loss.3} parent=0 // pred_fallthru
    _
  %v470 = vld [vmem:[%s0] sm:$0xff]
  %v471 = vld [vmem:[%s0 + $0x8] sm:$0xff]
  %v474 = vand.u32 %v470, 1
  %v475 = vand.u32 %v471, 1
  %v476 = vcvt.s32.f32 %v474
  %v477 = vcvt.s32.f32 %v475
  %v478 = vand.u32 %v470, 4294967294
  %v479 = vand.u32 %v471, 4294967294
  %v482 = vld [vmem:[%s1] sm:$0xff]
  %v483 = vpack.c.bf16 %v476, %v476
  %v484 = vpack.c.bf16 %v477, %v477
  %v485 = vld [vmem:[#allocation2] sm:$0xff]
  %v486 = vld [vmem:[#allocation2 + $0x8] sm:$0xff]
  %v487 = vld [vmem:[#allocation2 + $0x10] sm:$0xff]
  %v488 = vld [vmem:[#allocation2 + $0x18] sm:$0xff]
  %v489 = vld [vmem:[#allocation2 + $0x20] sm:$0xff]
  %v490 = vld [vmem:[#allocation2 + $0x28] sm:$0xff]
  %v491 = vld [vmem:[#allocation2 + $0x30] sm:$0xff]
  %v492 = vld [vmem:[#allocation2 + $0x38] sm:$0xff]
  %v493 = vld [vmem:[#allocation2 + $0x40] sm:$0xff]
  %v494 = vld [vmem:[#allocation2 + $0x48] sm:$0xff]
  %v495 = vld [vmem:[#allocation2 + $0x50] sm:$0xff]
  %v496 = vld [vmem:[#allocation2 + $0x58] sm:$0xff]
  %v497 = vld [vmem:[#allocation2 + $0x60] sm:$0xff]
  %v498 = vld [vmem:[#allocation2 + $0x68] sm:$0xff]
  %v499 = vld [vmem:[#allocation2 + $0x70] sm:$0xff]
  %v500 = vld [vmem:[#allocation2 + $0x78] sm:$0xff]
  %v501 = vld [vmem:[#allocation2 + $0x80] sm:$0xff]
  %v502 = vld [vmem:[#allocation2 + $0x88] sm:$0xff]
  %v503 = vld [vmem:[#allocation2 + $0x90] sm:$0xff]
  %v504 = vld [vmem:[#allocation2 + $0x98] sm:$0xff]
  %v505 = vld [vmem:[#allocation2 + $0xa0] sm:$0xff]
  %v506 = vld [vmem:[#allocation2 + $0xa8] sm:$0xff]
  %v507 = vld [vmem:[#allocation2 + $0xb0] sm:$0xff]
  %v508 = vld [vmem:[#allocation2 + $0xb8] sm:$0xff]
  %v509 = vld [vmem:[#allocation2 + $0xc0] sm:$0xff]
  %v510 = vld [vmem:[#allocation2 + $0xc8] sm:$0xff]
  %v511 = vld [vmem:[#allocation2 + $0xd0] sm:$0xff]
  %v512 = vld [vmem:[#allocation2 + $0xd8] sm:$0xff]
  %v513 = vld [vmem:[#allocation2 + $0xe0] sm:$0xff]
  %v514 = vld [vmem:[#allocation2 + $0xe8] sm:$0xff]
  %v515 = vld [vmem:[#allocation2 + $0xf0] sm:$0xff]
  %v516 = vld [vmem:[#allocation2 + $0xf8] sm:$0xff]
  %v517 = vld [vmem:[#allocation3] sm:$0xff]
  %519 = vset.pattern.permute.xlu0 0
  %520 = vperm.xlu0 %519, %v517
  %v521 = vpop.permute.xlu0 %520
  %v555 = vunpack.c.l.b16 %v485
  %v556 = vunpack.c.h.b16 %v485
  %v557 = vunpack.c.l.b16 %v486
  %v558 = vunpack.c.h.b16 %v486
  %v559 = vunpack.c.l.b16 %v487
  %v560 = vunpack.c.h.b16 %v487
  %v561 = vunpack.c.l.b16 %v488
  %v562 = vunpack.c.h.b16 %v488
  %v563 = vunpack.c.l.b16 %v489
  %v564 = vunpack.c.h.b16 %v489
  %v565 = vunpack.c.l.b16 %v490
  %v566 = vunpack.c.h.b16 %v490
  %v567 = vunpack.c.l.b16 %v491
  %v568 = vunpack.c.h.b16 %v491
  %v569 = vunpack.c.l.b16 %v492
  %v570 = vunpack.c.h.b16 %v492
  %v571 = vunpack.c.l.b16 %v493
  %v572 = vunpack.c.h.b16 %v493
  %v573 = vunpack.c.l.b16 %v494
  %v574 = vunpack.c.h.b16 %v494
  %v575 = vunpack.c.l.b16 %v495
  %v576 = vunpack.c.h.b16 %v495
  %v577 = vunpack.c.l.b16 %v496
  %v578 = vunpack.c.h.b16 %v496
  %v579 = vunpack.c.l.b16 %v497
  %v580 = vunpack.c.h.b16 %v497
  %v581 = vunpack.c.l.b16 %v498
  %v582 = vunpack.c.h.b16 %v498
  %v583 = vunpack.c.l.b16 %v499
  %v584 = vunpack.c.h.b16 %v499
  %v585 = vunpack.c.l.b16 %v500
  %v586 = vunpack.c.h.b16 %v500
  %v587 = vunpack.c.l.b16 %v501
  %v588 = vunpack.c.h.b16 %v501
  %v589 = vunpack.c.l.b16 %v502
  %v590 = vunpack.c.h.b16 %v502
  %v591 = vunpack.c.l.b16 %v503
  %v592 = vunpack.c.h.b16 %v503
  %v593 = vunpack.c.l.b16 %v504
  %v594 = vunpack.c.h.b16 %v504
  %v595 = vunpack.c.l.b16 %v505
  %v596 = vunpack.c.h.b16 %v505
  %v597 = vunpack.c.l.b16 %v506
  %v598 = vunpack.c.h.b16 %v506
  %v599 = vunpack.c.l.b16 %v507
  %v600 = vunpack.c.h.b16 %v507
  %v601 = vunpack.c.l.b16 %v508
  %v602 = vunpack.c.h.b16 %v508
  %v603 = vunpack.c.l.b16 %v509
  %v604 = vunpack.c.h.b16 %v509
  %v605 = vunpack.c.l.b16 %v510
  %v606 = vunpack.c.h.b16 %v510
  %v607 = vunpack.c.l.b16 %v511
  %v608 = vunpack.c.h.b16 %v511
  %v609 = vunpack.c.l.b16 %v512
  %v610 = vunpack.c.h.b16 %v512
  %v611 = vunpack.c.l.b16 %v513
  %v612 = vunpack.c.h.b16 %v513
  %v613 = vunpack.c.l.b16 %v514
  %v614 = vunpack.c.h.b16 %v514
  %v615 = vunpack.c.l.b16 %v515
  %v616 = vunpack.c.h.b16 %v515
  %v617 = vunpack.c.l.b16 %v516
  %v618 = vunpack.c.h.b16 %v516
  %v619 = vpack.c.b16 %v557, %v555
  %v620 = vpack.c.b16 %v558, %v556
  %v621 = vpack.c.b16 %v561, %v559
  %v622 = vpack.c.b16 %v562, %v560
  %v623 = vpack.c.b16 %v565, %v563
  %v624 = vpack.c.b16 %v566, %v564
  %v625 = vpack.c.b16 %v569, %v567
  %v626 = vpack.c.b16 %v570, %v568
  %v627 = vpack.c.b16 %v573, %v571
  %v628 = vpack.c.b16 %v574, %v572
  %v629 = vpack.c.b16 %v577, %v575
  %v630 = vpack.c.b16 %v578, %v576
  %v631 = vpack.c.b16 %v581, %v579
  %v632 = vpack.c.b16 %v582, %v580
  %v633 = vpack.c.b16 %v585, %v583
  %v634 = vpack.c.b16 %v586, %v584
  %v635 = vpack.c.b16 %v589, %v587
  %v636 = vpack.c.b16 %v590, %v588
  %v637 = vpack.c.b16 %v593, %v591
  %v638 = vpack.c.b16 %v594, %v592
  %v639 = vpack.c.b16 %v597, %v595
  %v640 = vpack.c.b16 %v598, %v596
  %v641 = vpack.c.b16 %v601, %v599
  %v642 = vpack.c.b16 %v602, %v600
  %v643 = vpack.c.b16 %v605, %v603
  %v644 = vpack.c.b16 %v606, %v604
  %v645 = vpack.c.b16 %v609, %v607
  %v646 = vpack.c.b16 %v610, %v608
  %v647 = vpack.c.b16 %v613, %v611
  %v648 = vpack.c.b16 %v614, %v612
  %v649 = vpack.c.b16 %v617, %v615
  %v650 = vpack.c.b16 %v618, %v616
  %683 = vmatprep.subr.bf16.mxu0 %v634
  %684 = vmatpush1.bf16.msra.mxu0 %v633
  %685 = vmatprep.subr.bf16.mxu0 %v632
  %686 = vmatpush1.bf16.msra.mxu0 %v631
  %687 = vmatprep.subr.bf16.mxu0 %v630
  %688 = vmatpush1.bf16.msra.mxu0 %v629
  %689 = vmatprep.subr.bf16.mxu0 %v628
  %690 = vmatpush1.bf16.msra.mxu0 %v627
  %691 = vmatprep.subr.bf16.mxu0 %v626
  %692 = vmatpush1.bf16.msra.mxu0 %v625
  %693 = vmatprep.subr.bf16.mxu0 %v624
  %694 = vmatpush1.bf16.msra.mxu0 %v623
  %695 = vmatprep.subr.bf16.mxu0 %v622
  %696 = vmatpush1.bf16.msra.mxu0 %v621
  %697 = vmatprep.subr.bf16.mxu0 %v620
  %698 = vmatpush1.bf16.msra.mxu0 %v619
  %699 = vmatprep.subr.bf16.mxu0 %v650
  %700 = vmatpush2.bf16.msra.mxu0 %v649
  %701 = vmatprep.subr.bf16.mxu0 %v648
  %702 = vmatpush2.bf16.msra.mxu0 %v647
  %703 = vmatprep.subr.bf16.mxu0 %v646
  %704 = vmatpush2.bf16.msra.mxu0 %v645
  %705 = vmatprep.subr.bf16.mxu0 %v644
  %706 = vmatpush2.bf16.msra.mxu0 %v643
  %707 = vmatprep.subr.bf16.mxu0 %v642
  %708 = vmatpush2.bf16.msra.mxu0 %v641
  %709 = vmatprep.subr.bf16.mxu0 %v640
  %710 = vmatpush2.bf16.msra.mxu0 %v639
  %711 = vmatprep.subr.bf16.mxu0 %v638
  %712 = vmatpush2.bf16.msra.mxu0 %v637
  %713 = vmatprep.subr.bf16.mxu0 %v636
  %714 = vmatpush2.bf16.msra.mxu0 %v635
  %715 = vmatprep.mubr.bf16.mxu0 %v484
  %716 = vmatmul.mubr.bf16.gmra.mxu0 %v483
  %v717 = vpop.f32.mrf.mxu0
  %v718 = vadd.f32 %v521, %v717
  %v719 = vpop.f32.mrf.mxu0
  %v720 = vadd.f32 %v521, %v719
  %v721 = vpop.f32.mrf.mxu0
  %v722 = vpop.f32.mrf.mxu0
  %723 = vdwg.mxu0
  %s724 = smul.u32 0, 256
  %s725 = sadd.s32 %s724, 1
  %v726 = vlaneseq
  %v727 = vand.u32 %v726, 127
  %v728 = vadd.s32 %v727, 128
  %v729 = vstv %s725
  %v730 = vadd.s32 %v729, %v727
  %v731 = vadd.s32 %v729, %v728
  %v732 = vcvt.s32.f32 %v730
  %v733 = vcvt.s32.f32 %v731
  %735 = vset.pattern.permute.xlu0 0
  %736 = vperm.xlu0 %735, %v482
  %v737 = vpop.permute.xlu0 %736
  %v739 = vadd.f32 %v737, %v732
  %v740 = vadd.f32 %v737, %v733
  %v741 = vsub.f32 %v739, %v718
  %v742 = vsub.f32 %v740, %v720
  %v743 = vsub.f32 %v741, 1.0
  %v744 = vsub.f32 %v742, 1.0
  %v745 = vadd.f32 %v743, %v476
  %v746 = vadd.f32 %v744, %v477
  %v747 = vsub.f32 %v737, %v718
  %v748 = vsub.f32 %v737, %v720
  %v749 = vmul.f32 %v476, %v732
  %v750 = vmul.f32 %v477, %v733
  %v751 = vadd.f32 %v747, %v749
  %v752 = vadd.f32 %v748, %v750
  %v753 = vmul.f32 %v741, %v745
  %v754 = vmul.f32 %v742, %v746
  %v755 = vmax.f32 %v753, 1e-12
  %v756 = vmax.f32 %v754, 1e-12
  %v757 = vrcp.pop %v755
  %v758 = vrcp.pop %v756
  %v759 = vmul.f32 %v751, %v757
  %v760 = vmul.f32 %v752, %v758
  %v761 = vld [vmem:[#allocation4] sm:$0xff]
  %v762 = vmul.f32 %v478, %v759
  %v763 = vmul.f32 %v479, %v760
  %v764 = vadd.f32 %v762, %v763
  %765 = vadd.xlane.f32.xlu0 %v764
  %v766 = vpop.xlane.xlu0 %765
  %v767 = vadd.f32 %v761, %v766
  %vm768 = vcmask 7168
  %769 = vst.msk [vmem:[#allocation4] sm:$0xff] %vm768, %v767
  %v770 = vld [vmem:[#allocation3] sm:$0xff]
  %v771 = vadd.f32 %v476, %v477
  %772 = vadd.xlane.f32.xlu0 %v771
  %v773 = vpop.xlane.xlu0 %772
  %v774 = vadd.f32 %v770, %v773
  %775 = vst.msk [vmem:[#allocation3] sm:$0xff] %vm768, %v774
  // Predicated region
  $region14: #{lovasz_loss.3} parent=0 // pred_check
    %p776 = pneg %p11
  $region15: #{lovasz_loss.3} parent=0 // pred_check_branch
    %778 = sbr.rel (%p776) target = $region17
  $region16: #{lovasz_loss.3} parent=0 // pred_region
    %v779 = vld [vmem:[#allocation4] sm:$0xff]
    %780 = vst.msk [vmem:[%s2] sm:$0xff] %vm768, %v779
  $region17: #{lovasz_loss.3} parent=0 // pred_fallthru
    _
  // Predicated region
  $region18: #{lovasz_loss.3} parent=0 // pred_check
    _
  $region19: #{lovasz_loss.3} parent=0 // pred_check_branch
    %782 = sbr.rel (0) target = $region21
  $region20: #{lovasz_loss.3} parent=0 // pred_region
    _
  $region21: #{lovasz_loss.3} parent=0 // pred_fallthru
    _
  // Predicated region
  $region22: #{lovasz_loss.3} parent=0 // pred_check
    _
  $region23: #{lovasz_loss.3} parent=0 // pred_check_branch
    %784 = sbr.rel (0) target = $region25
  $region24: #{lovasz_loss.3} parent=0 // pred_region
    _
  $region25: #{lovasz_loss.3} parent=0 // pred_fallthru
    _

</llo_original>
